<compile_context>
chip_gen: v5e
topology: v5e:2x2
jax: 0.10.0
libtpu: 0.0.40
codegen_flags: <defaults>
</compile_context>

<pallas_src>
import functools

import jax
import jax.numpy as jnp
from jax import lax
from jax.experimental import pallas as pl
from jax.experimental.pallas import tpu as pltpu


# -----------------------------------------------------------------------------
# Fused kernel: all LSTM layers (time recurrence in-kernel) + final Linear.
# -----------------------------------------------------------------------------
def fused_lstm_fc_kernel(*refs, T, TB, H, num_layers):
    """refs = [x, (w_ih, w_hh, b) * num_layers, fc_w, fc_b,   # inputs
               out,                                            # output
               gx_scr, seq_scr]                                # VMEM scratch

    Gate column order is [i, f, o, g] (wrapper reorders PyTorch's [i, f, g, o])
    so one sigmoid covers lanes [0:3H) and one tanh covers [3H:4H).
    """
    n_in = 1 + 3 * num_layers + 2
    x_ref = refs[0]
    layer_refs = refs[1:1 + 3 * num_layers]
    fc_w_ref = refs[1 + 3 * num_layers]
    fc_b_ref = refs[2 + 3 * num_layers]
    out_ref = refs[n_in]
    gx_scr, seq_scr = refs[n_in + 1], refs[n_in + 2]

    h = jnp.zeros((TB, H), jnp.float32)
    c = jnp.zeros((TB, H), jnp.float32)

    for layer in range(num_layers):
        w_ih_ref, w_hh_ref, b_ref = layer_refs[3 * layer:3 * layer + 3]

        # Hoisted input projection: ONE (T*TB, D_in) x (D_in, 4H) bf16 matmul
        # per layer, f32 accumulation (only the h-recurrence is serial).
        inp = x_ref[...] if layer == 0 else seq_scr[...]
        gx_scr[...] = (jnp.dot(inp, w_ih_ref[...],
                               preferred_element_type=jnp.float32)
                       + b_ref[...])

        w_hh = w_hh_ref[...]                    # (H, 4H) bf16, loaded once/layer
        h = jnp.zeros((TB, H), jnp.float32)     # h_0 = zeros
        c = jnp.zeros((TB, H), jnp.float32)     # c_0 = zeros
        store_seq = layer < num_layers - 1      # last layer's sequence is dead

        def step(t, carry, w_hh=w_hh, store_seq=store_seq):
            h, c = carry
            row = pl.multiple_of(t * TB, TB)
            gates = (gx_scr[pl.ds(row, TB), :]
                     + jnp.dot(h.astype(jnp.bfloat16), w_hh,
                               preferred_element_type=jnp.float32))  # (TB, 4H)
            sig = jax.nn.sigmoid(gates[:, :3 * H])   # i | f | o, one EUP pass
            g = jnp.tanh(gates[:, 3 * H:])           # g, one EUP pass
            c = sig[:, H:2 * H] * c + sig[:, :H] * g
            h = sig[:, 2 * H:] * jnp.tanh(c)
            if store_seq:                            # next layer's input seq
                seq_scr[pl.ds(row, TB), :] = h.astype(seq_scr.dtype)
            return h, c

        # h, c stay in vregs across the serial recurrence (no per-step VMEM
        # store->load on the critical path).
        h, c = lax.fori_loop(0, T, step, (h, c),
                             unroll=True if T <= 16 else 8)
        # TODO(synk): nn.LSTM dropout(p=0.2) between layers applies only in
        # training mode; inference forward omits it.

    # Fused final Linear on the last timestep's hidden state (== out[:, -1, :]).
    out_ref[...] = (jnp.dot(h, fc_w_ref[...],
                            preferred_element_type=jnp.float32)
                    + fc_b_ref[...])


# -----------------------------------------------------------------------------
# Wrapper: layout prep (transpose/pad/tile) + single pallas_call.
# -----------------------------------------------------------------------------
def lstm_model_forward(x_btd, params, *, batch_tile=None):
    """x_btd: (B, T, D) batch-first float32, like the PyTorch module."""
    B, T, D = x_btd.shape
    num_layers = len(params["lstm"])
    assert num_layers >= 1
    H = params["lstm"][0]["w_hh_t"].shape[0]
    O = params["fc_w_t"].shape[1]

    SUBLANE = 8
    TB = batch_tile if batch_tile is not None else min(max(B, SUBLANE), 128)
    TB = -(-TB // SUBLANE) * SUBLANE                 # round tile to sublane width
    B_pad = -(-B // TB) * TB
    nb = B_pad // TB                                 # batch-tile grid (parallel)

    x_tm = jnp.transpose(x_btd, (1, 0, 2)).astype(jnp.bfloat16)  # (T, B, D)
    if B_pad != B:
        x_tm = jnp.pad(x_tm, ((0, 0), (0, B_pad - B), (0, 0)))
    # (T, B_pad, D) -> (nb, T*TB, D): one time-major slab per batch tile.
    x_tiles = (x_tm.reshape(T, nb, TB, D)
               .transpose(1, 0, 2, 3)
               .reshape(nb, T * TB, D))

    args = [x_tiles]
    in_specs = [pl.BlockSpec((None, T * TB, D), lambda b: (b, 0, 0))]
    for layer in params["lstm"]:
        for w in (layer["w_ih_t"], layer["w_hh_t"], layer["b"]):
            args.append(w)
            in_specs.append(pl.BlockSpec(w.shape, lambda b: (0, 0)))
    for w in (params["fc_w_t"], params["fc_b"]):
        args.append(w)
        in_specs.append(pl.BlockSpec(w.shape, lambda b: (0, 0)))

    # VMEM budget: double-buffered per-tile IO + resident weights + scratch.
    weight_bytes = sum(int(w.size) * w.dtype.itemsize for w in args[1:])
    io_bytes = 2 * (T * TB * D * 2) + 2 * (TB * O * 4)
    scratch_bytes = T * TB * 4 * H * 4 + T * TB * H * 2
    vmem_limit = int(min(64 << 20,
                         max(8 << 20,
                             2 * (weight_bytes + io_bytes + scratch_bytes))))
    # TODO(synk): if T*TB*H grows so scratch_bytes nears the VMEM ceiling,
    # time-chunk the hoisted gx projection (pltpu.emit_pipeline) instead of
    # materializing the whole (T*TB, 4H) slab.

    out = pl.pallas_call(
        functools.partial(fused_lstm_fc_kernel,
                          T=T, TB=TB, H=H, num_layers=num_layers),
        grid=(nb,),
        out_shape=jax.ShapeDtypeStruct((nb, TB, O), jnp.float32),
        in_specs=in_specs,
        out_specs=pl.BlockSpec((None, TB, O), lambda b: (b, 0, 0)),
        scratch_shapes=[
            pltpu.VMEM((T * TB, 4 * H), jnp.float32),   # hoisted input gates
            pltpu.VMEM((T * TB, H), jnp.bfloat16),      # inter-layer hidden seq
        ],
        compiler_params=pltpu.CompilerParams(
            dimension_semantics=("parallel",),          # batch tiles -> both TCs
            vmem_limit_bytes=vmem_limit),
    )(*args)
    return out.reshape(B_pad, O)[:B]                    # drop batch padding


# -----------------------------------------------------------------------------
# Parameter init (PyTorch-style); weights pre-transposed, gate columns
# reordered [i,f,g,o] -> [i,f,o,g], MXU operands stored in bf16.
# -----------------------------------------------------------------------------
def _reorder_gate_rows(w, H):
    return jnp.concatenate([w[:2 * H], w[3 * H:4 * H], w[2 * H:3 * H]], axis=0)


def init_params(key, input_size, hidden_size, num_layers, output_size):
    H = hidden_size
    bound = 1.0 / (H ** 0.5)
    params = {"lstm": []}
    for layer in range(num_layers):
        in_dim = input_size if layer == 0 else H
        key, k1, k2, k3, k4 = jax.random.split(key, 5)
        w_ih = jax.random.uniform(k1, (4 * H, in_dim), minval=-bound,
                                  maxval=bound, dtype=jnp.float32)
        w_hh = jax.random.uniform(k2, (4 * H, H), minval=-bound,
                                  maxval=bound, dtype=jnp.float32)
        b_ih = jax.random.uniform(k3, (4 * H,), minval=-bound,
                                  maxval=bound, dtype=jnp.float32)
        b_hh = jax.random.uniform(k4, (4 * H,), minval=-bound,
                                  maxval=bound, dtype=jnp.float32)
        params["lstm"].append({
            "w_ih_t": _reorder_gate_rows(w_ih, H).T.astype(jnp.bfloat16),  # (D_in,4H)
            "w_hh_t": _reorder_gate_rows(w_hh, H).T.astype(jnp.bfloat16),  # (H,4H)
            "b": _reorder_gate_rows(b_ih + b_hh, H).reshape(1, 4 * H),     # (1,4H) f32
        })
    key, k5, k6 = jax.random.split(key, 3)
    fc_w = jax.random.uniform(k5, (output_size, H), minval=-bound,
                              maxval=bound, dtype=jnp.float32)
    fc_b = jax.random.uniform(k6, (output_size,), minval=-bound,
                              maxval=bound, dtype=jnp.float32)
    params["fc_w_t"] = fc_w.T                                   # (H, O) f32
    params["fc_b"] = fc_b.reshape(1, output_size)               # (1, O) f32
    return params


# -----------------------------------------------------------------------------
# Pure-JAX reference with the SAME numerics as the kernel (bf16 matmul operands,
# f32 accumulation, [i,f,o,g] gate layout) == PyTorch f32 LSTM+Linear forward
# up to bf16 operand rounding.
# -----------------------------------------------------------------------------
def reference_forward(x_btd, params):
    B, T, D = x_btd.shape
    seq = jnp.transpose(x_btd, (1, 0, 2))          # (T, B, D) f32
    h = None
    for layer in params["lstm"]:
        w_ih_t, w_hh_t, b = layer["w_ih_t"], layer["w_hh_t"], layer["b"]
        H = w_hh_t.shape[0]
        h = jnp.zeros((B, H), jnp.float32)
        c = jnp.zeros((B, H), jnp.float32)
        outs = []
        for t in range(T):
            gates = (jnp.dot(seq[t].astype(jnp.bfloat16), w_ih_t,
                             preferred_element_type=jnp.float32)
                     + jnp.dot(h.astype(jnp.bfloat16), w_hh_t,
                               preferred_element_type=jnp.float32)
                     + b)
            i = jax.nn.sigmoid(gates[:, 0:H])
            f = jax.nn.sigmoid(gates[:, H:2 * H])
            o = jax.nn.sigmoid(gates[:, 2 * H:3 * H])
            g = jnp.tanh(gates[:, 3 * H:4 * H])
            c = f * c + i * g
            h = o * jnp.tanh(c)
            outs.append(h)
        seq = jnp.stack(outs, axis=0)
    return jnp.dot(h, params["fc_w_t"]) + params["fc_b"]


if __name__ == "__main__":
    # Small shapes consistent with the module: batch=2, seq=8, input=4,
    # hidden=32, num_layers=2, output=1.
    B, T, D = 2, 8, 4
    hidden_size, num_layers, output_size = 32, 2, 1

    key = jax.random.PRNGKey(0)
    key, kx = jax.random.split(key)
    x = jax.random.normal(kx, (B, T, D), dtype=jnp.float32)

    params = init_params(key, D, hidden_size, num_layers, output_size)

    out = lstm_model_forward(x, params)
    jax.block_until_ready(out)
    assert out.shape == (B, output_size), out.shape

    ref = reference_forward(x, params)
    assert jnp.allclose(out, ref, rtol=5e-3, atol=5e-3), (out, ref)

    print("KERNEL_OK")
</pallas_src>

<mosaic_0001>
module attributes {stable_mosaic.version = 11 : i64} {
  func.func @fused_lstm_fc_kernel(%arg0: i32, %arg1: memref<1x64x4xbf16, #tpu.memory_space<vmem>>, %arg2: memref<4x128xbf16, #tpu.memory_space<vmem>>, %arg3: memref<32x128xbf16, #tpu.memory_space<vmem>>, %arg4: memref<1x128xf32, #tpu.memory_space<vmem>>, %arg5: memref<32x128xbf16, #tpu.memory_space<vmem>>, %arg6: memref<32x128xbf16, #tpu.memory_space<vmem>>, %arg7: memref<1x128xf32, #tpu.memory_space<vmem>>, %arg8: memref<32x1xf32, #tpu.memory_space<vmem>>, %arg9: memref<1x1xf32, #tpu.memory_space<vmem>>, %arg10: memref<1x8x1xf32, #tpu.memory_space<vmem>>, %arg11: memref<64x128xf32, #tpu.memory_space<vmem>>, %arg12: memref<64x32xbf16, #tpu.memory_space<vmem>>) attributes {dimension_semantics = [#tpu.dimension_semantics<parallel>], iteration_bounds = array<i64: 1>, scalar_prefetch = 0 : i64, scratch_operands = 2 : i64, tpu.core_type = #tpu.core_type<tc>, window_params = [{transform_indices = @transform_0, window_bounds = array<i64: 1, 64, 4>}, {pipeline_mode = #tpu.pipeline_mode<synchronous>, transform_indices = @transform_1, window_bounds = array<i64: 4, 128>}, {pipeline_mode = #tpu.pipeline_mode<synchronous>, transform_indices = @transform_2, window_bounds = array<i64: 32, 128>}, {pipeline_mode = #tpu.pipeline_mode<synchronous>, transform_indices = @transform_3, window_bounds = array<i64: 1, 128>}, {pipeline_mode = #tpu.pipeline_mode<synchronous>, transform_indices = @transform_4, window_bounds = array<i64: 32, 128>}, {pipeline_mode = #tpu.pipeline_mode<synchronous>, transform_indices = @transform_5, window_bounds = array<i64: 32, 128>}, {pipeline_mode = #tpu.pipeline_mode<synchronous>, transform_indices = @transform_6, window_bounds = array<i64: 1, 128>}, {pipeline_mode = #tpu.pipeline_mode<synchronous>, transform_indices = @transform_7, window_bounds = array<i64: 32, 1>}, {pipeline_mode = #tpu.pipeline_mode<synchronous>, transform_indices = @transform_8, window_bounds = array<i64: 1, 1>}, {transform_indices = @transform_9, window_bounds = array<i64: 1, 8, 1>}]} {
    %c0 = arith.constant 0 : index
    %c0_0 = arith.constant 0 : index
    %c0_1 = arith.constant 0 : index
    %0 = vector.load %arg1[%c0, %c0_0, %c0_1] : memref<1x64x4xbf16, #tpu.memory_space<vmem>>, vector<1x64x4xbf16>
    %1 = vector.shape_cast %0 : vector<1x64x4xbf16> to vector<64x4xbf16>
    %c0_2 = arith.constant 0 : index
    %c0_3 = arith.constant 0 : index
    %2 = vector.load %arg2[%c0_2, %c0_3] : memref<4x128xbf16, #tpu.memory_space<vmem>>, vector<4x128xbf16>
    %cst = arith.constant dense<0.000000e+00> : vector<64x128xf32>
    %3 = tpu.matmul %1, %2, %cst {dimension_numbers = #tpu.dot_dimension_numbers<[1], [0], [0], [1], [0, 0, 1, 1], [], []>} : vector<64x4xbf16>, vector<4x128xbf16>, vector<64x128xf32> -> vector<64x128xf32>
    %c0_4 = arith.constant 0 : index
    %c0_5 = arith.constant 0 : index
    %4 = vector.load %arg4[%c0_4, %c0_5] : memref<1x128xf32, #tpu.memory_space<vmem>>, vector<1x128xf32>
    %5 = vector.broadcast %4 : vector<1x128xf32> to vector<64x128xf32>
    %6 = arith.addf %3, %5 : vector<64x128xf32>
    %c0_6 = arith.constant 0 : index
    %c0_7 = arith.constant 0 : index
    %7 = vector.load %arg11[%c0_6, %c0_7] : memref<64x128xf32, #tpu.memory_space<vmem>>, vector<64x128xf32>
    tpu.vector_store %arg11[%c0_6, %c0_7], %6 {strides = array<i32>} : memref<64x128xf32, #tpu.memory_space<vmem>>, vector<64x128xf32>,
    %c0_8 = arith.constant 0 : index
    %c0_9 = arith.constant 0 : index
    %8 = vector.load %arg3[%c0_8, %c0_9] : memref<32x128xbf16, #tpu.memory_space<vmem>>, vector<32x128xbf16>
    %cst_10 = arith.constant 0.000000e+00 : f32
    %9 = vector.broadcast %cst_10 : f32 to vector<8x32xf32>
    %cst_11 = arith.constant 0.000000e+00 : f32
    %10 = vector.broadcast %cst_11 : f32 to vector<8x32xf32>
    %c0_i32 = arith.constant 0 : i32
    %c8_i32 = arith.constant 8 : i32
    %11 = arith.muli %c0_i32, %c8_i32 : i32
    %12 = tpu.assume_multiple %11, 8 : i32
    %13 = arith.index_cast %12 : i32 to index
    %c0_12 = arith.constant 0 : index
    %14 = vector.load %arg11[%13, %c0_12] : memref<64x128xf32, #tpu.memory_space<vmem>>, vector<8x128xf32>
    %15 = arith.truncf %9 : vector<8x32xf32> to vector<8x32xbf16>
    %cst_13 = arith.constant dense<0.000000e+00> : vector<8x128xf32>
    %16 = tpu.matmul %15, %8, %cst_13 {dimension_numbers = #tpu.dot_dimension_numbers<[1], [0], [0], [1], [0, 0, 1, 1], [], []>} : vector<8x32xbf16>, vector<32x128xbf16>, vector<8x128xf32> -> vector<8x128xf32>
    %17 = arith.addf %14, %16 : vector<8x128xf32>
    %18 = vector.extract_strided_slice %17 {offsets = [0, 0], sizes = [8, 96], strides = [1, 1]} : vector<8x128xf32> to vector<8x96xf32>
    %19 = arith.negf %18 : vector<8x96xf32>
    %20 = math.exp %19 : vector<8x96xf32>
    %cst_14 = arith.constant 1.000000e+00 : f32
    %21 = vector.broadcast %cst_14 : f32 to vector<8x96xf32>
    %22 = arith.addf %21, %20 : vector<8x96xf32>
    %23 = arith.divf %21, %22 : vector<8x96xf32>
    %24 = vector.extract_strided_slice %17 {offsets = [0, 96], sizes = [8, 32], strides = [1, 1]} : vector<8x128xf32> to vector<8x32xf32>
    %25 = math.tanh %24 : vector<8x32xf32>
    %26 = vector.extract_strided_slice %23 {offsets = [0, 32], sizes = [8, 32], strides = [1, 1]} : vector<8x96xf32> to vector<8x32xf32>
    %27 = arith.mulf %26, %10 : vector<8x32xf32>
    %28 = vector.extract_strided_slice %23 {offsets = [0, 0], sizes = [8, 32], strides = [1, 1]} : vector<8x96xf32> to vector<8x32xf32>
    %29 = arith.mulf %28, %25 : vector<8x32xf32>
    %30 = arith.addf %27, %29 : vector<8x32xf32>
    %31 = vector.extract_strided_slice %23 {offsets = [0, 64], sizes = [8, 32], strides = [1, 1]} : vector<8x96xf32> to vector<8x32xf32>
    %32 = math.tanh %30 : vector<8x32xf32>
    %33 = arith.mulf %31, %32 : vector<8x32xf32>
    %34 = arith.truncf %33 : vector<8x32xf32> to vector<8x32xbf16>
    %35 = arith.index_cast %12 : i32 to index
    %c0_15 = arith.constant 0 : index
    %36 = vector.load %arg12[%35, %c0_15] : memref<64x32xbf16, #tpu.memory_space<vmem>>, vector<8x32xbf16>
    tpu.vector_store %arg12[%35, %c0_15], %34 {strides = array<i32>} : memref<64x32xbf16, #tpu.memory_space<vmem>>, vector<8x32xbf16>,
    %c1_i32 = arith.constant 1 : i32
    %c8_i32_16 = arith.constant 8 : i32
    %37 = arith.muli %c1_i32, %c8_i32_16 : i32
    %38 = tpu.assume_multiple %37, 8 : i32
    %39 = arith.index_cast %38 : i32 to index
    %c0_17 = arith.constant 0 : index
    %40 = vector.load %arg11[%39, %c0_17] : memref<64x128xf32, #tpu.memory_space<vmem>>, vector<8x128xf32>
    %41 = arith.truncf %33 : vector<8x32xf32> to vector<8x32xbf16>
    %cst_18 = arith.constant dense<0.000000e+00> : vector<8x128xf32>
    %42 = tpu.matmul %41, %8, %cst_18 {dimension_numbers = #tpu.dot_dimension_numbers<[1], [0], [0], [1], [0, 0, 1, 1], [], []>} : vector<8x32xbf16>, vector<32x128xbf16>, vector<8x128xf32> -> vector<8x128xf32>
    %43 = arith.addf %40, %42 : vector<8x128xf32>
    %44 = vector.extract_strided_slice %43 {offsets = [0, 0], sizes = [8, 96], strides = [1, 1]} : vector<8x128xf32> to vector<8x96xf32>
    %45 = arith.negf %44 : vector<8x96xf32>
    %46 = math.exp %45 : vector<8x96xf32>
    %cst_19 = arith.constant 1.000000e+00 : f32
    %47 = vector.broadcast %cst_19 : f32 to vector<8x96xf32>
    %48 = arith.addf %47, %46 : vector<8x96xf32>
    %49 = arith.divf %47, %48 : vector<8x96xf32>
    %50 = vector.extract_strided_slice %43 {offsets = [0, 96], sizes = [8, 32], strides = [1, 1]} : vector<8x128xf32> to vector<8x32xf32>
    %51 = math.tanh %50 : vector<8x32xf32>
    %52 = vector.extract_strided_slice %49 {offsets = [0, 32], sizes = [8, 32], strides = [1, 1]} : vector<8x96xf32> to vector<8x32xf32>
    %53 = arith.mulf %52, %30 : vector<8x32xf32>
    %54 = vector.extract_strided_slice %49 {offsets = [0, 0], sizes = [8, 32], strides = [1, 1]} : vector<8x96xf32> to vector<8x32xf32>
    %55 = arith.mulf %54, %51 : vector<8x32xf32>
    %56 = arith.addf %53, %55 : vector<8x32xf32>
    %57 = vector.extract_strided_slice %49 {offsets = [0, 64], sizes = [8, 32], strides = [1, 1]} : vector<8x96xf32> to vector<8x32xf32>
    %58 = math.tanh %56 : vector<8x32xf32>
    %59 = arith.mulf %57, %58 : vector<8x32xf32>
    %60 = arith.truncf %59 : vector<8x32xf32> to vector<8x32xbf16>
    %61 = arith.index_cast %38 : i32 to index
    %c0_20 = arith.constant 0 : index
    %62 = vector.load %arg12[%61, %c0_20] : memref<64x32xbf16, #tpu.memory_space<vmem>>, vector<8x32xbf16>
    tpu.vector_store %arg12[%61, %c0_20], %60 {strides = array<i32>} : memref<64x32xbf16, #tpu.memory_space<vmem>>, vector<8x32xbf16>,
    %c2_i32 = arith.constant 2 : i32
    %c8_i32_21 = arith.constant 8 : i32
    %63 = arith.muli %c2_i32, %c8_i32_21 : i32
    %64 = tpu.assume_multiple %63, 8 : i32
    %65 = arith.index_cast %64 : i32 to index
    %c0_22 = arith.constant 0 : index
    %66 = vector.load %arg11[%65, %c0_22] : memref<64x128xf32, #tpu.memory_space<vmem>>, vector<8x128xf32>
    %67 = arith.truncf %59 : vector<8x32xf32> to vector<8x32xbf16>
    %cst_23 = arith.constant dense<0.000000e+00> : vector<8x128xf32>
    %68 = tpu.matmul %67, %8, %cst_23 {dimension_numbers = #tpu.dot_dimension_numbers<[1], [0], [0], [1], [0, 0, 1, 1], [], []>} : vector<8x32xbf16>, vector<32x128xbf16>, vector<8x128xf32> -> vector<8x128xf32>
    %69 = arith.addf %66, %68 : vector<8x128xf32>
    %70 = vector.extract_strided_slice %69 {offsets = [0, 0], sizes = [8, 96], strides = [1, 1]} : vector<8x128xf32> to vector<8x96xf32>
    %71 = arith.negf %70 : vector<8x96xf32>
    %72 = math.exp %71 : vector<8x96xf32>
    %cst_24 = arith.constant 1.000000e+00 : f32
    %73 = vector.broadcast %cst_24 : f32 to vector<8x96xf32>
    %74 = arith.addf %73, %72 : vector<8x96xf32>
    %75 = arith.divf %73, %74 : vector<8x96xf32>
    %76 = vector.extract_strided_slice %69 {offsets = [0, 96], sizes = [8, 32], strides = [1, 1]} : vector<8x128xf32> to vector<8x32xf32>
    %77 = math.tanh %76 : vector<8x32xf32>
    %78 = vector.extract_strided_slice %75 {offsets = [0, 32], sizes = [8, 32], strides = [1, 1]} : vector<8x96xf32> to vector<8x32xf32>
    %79 = arith.mulf %78, %56 : vector<8x32xf32>
    %80 = vector.extract_strided_slice %75 {offsets = [0, 0], sizes = [8, 32], strides = [1, 1]} : vector<8x96xf32> to vector<8x32xf32>
    %81 = arith.mulf %80, %77 : vector<8x32xf32>
    %82 = arith.addf %79, %81 : vector<8x32xf32>
    %83 = vector.extract_strided_slice %75 {offsets = [0, 64], sizes = [8, 32], strides = [1, 1]} : vector<8x96xf32> to vector<8x32xf32>
    %84 = math.tanh %82 : vector<8x32xf32>
    %85 = arith.mulf %83, %84 : vector<8x32xf32>
    %86 = arith.truncf %85 : vector<8x32xf32> to vector<8x32xbf16>
    %87 = arith.index_cast %64 : i32 to index
    %c0_25 = arith.constant 0 : index
    %88 = vector.load %arg12[%87, %c0_25] : memref<64x32xbf16, #tpu.memory_space<vmem>>, vector<8x32xbf16>
    tpu.vector_store %arg12[%87, %c0_25], %86 {strides = array<i32>} : memref<64x32xbf16, #tpu.memory_space<vmem>>, vector<8x32xbf16>,
    %c3_i32 = arith.constant 3 : i32
    %c8_i32_26 = arith.constant 8 : i32
    %89 = arith.muli %c3_i32, %c8_i32_26 : i32
    %90 = tpu.assume_multiple %89, 8 : i32
    %91 = arith.index_cast %90 : i32 to index
    %c0_27 = arith.constant 0 : index
    %92 = vector.load %arg11[%91, %c0_27] : memref<64x128xf32, #tpu.memory_space<vmem>>, vector<8x128xf32>
    %93 = arith.truncf %85 : vector<8x32xf32> to vector<8x32xbf16>
    %cst_28 = arith.constant dense<0.000000e+00> : vector<8x128xf32>
    %94 = tpu.matmul %93, %8, %cst_28 {dimension_numbers = #tpu.dot_dimension_numbers<[1], [0], [0], [1], [0, 0, 1, 1], [], []>} : vector<8x32xbf16>, vector<32x128xbf16>, vector<8x128xf32> -> vector<8x128xf32>
    %95 = arith.addf %92, %94 : vector<8x128xf32>
    %96 = vector.extract_strided_slice %95 {offsets = [0, 0], sizes = [8, 96], strides = [1, 1]} : vector<8x128xf32> to vector<8x96xf32>
    %97 = arith.negf %96 : vector<8x96xf32>
    %98 = math.exp %97 : vector<8x96xf32>
    %cst_29 = arith.constant 1.000000e+00 : f32
    %99 = vector.broadcast %cst_29 : f32 to vector<8x96xf32>
    %100 = arith.addf %99, %98 : vector<8x96xf32>
    %101 = arith.divf %99, %100 : vector<8x96xf32>
    %102 = vector.extract_strided_slice %95 {offsets = [0, 96], sizes = [8, 32], strides = [1, 1]} : vector<8x128xf32> to vector<8x32xf32>
    %103 = math.tanh %102 : vector<8x32xf32>
    %104 = vector.extract_strided_slice %101 {offsets = [0, 32], sizes = [8, 32], strides = [1, 1]} : vector<8x96xf32> to vector<8x32xf32>
    %105 = arith.mulf %104, %82 : vector<8x32xf32>
    %106 = vector.extract_strided_slice %101 {offsets = [0, 0], sizes = [8, 32], strides = [1, 1]} : vector<8x96xf32> to vector<8x32xf32>
    %107 = arith.mulf %106, %103 : vector<8x32xf32>
    %108 = arith.addf %105, %107 : vector<8x32xf32>
    %109 = vector.extract_strided_slice %101 {offsets = [0, 64], sizes = [8, 32], strides = [1, 1]} : vector<8x96xf32> to vector<8x32xf32>
    %110 = math.tanh %108 : vector<8x32xf32>
    %111 = arith.mulf %109, %110 : vector<8x32xf32>
    %112 = arith.truncf %111 : vector<8x32xf32> to vector<8x32xbf16>
    %113 = arith.index_cast %90 : i32 to index
    %c0_30 = arith.constant 0 : index
    %114 = vector.load %arg12[%113, %c0_30] : memref<64x32xbf16, #tpu.memory_space<vmem>>, vector<8x32xbf16>
    tpu.vector_store %arg12[%113, %c0_30], %112 {strides = array<i32>} : memref<64x32xbf16, #tpu.memory_space<vmem>>, vector<8x32xbf16>,
    %c4_i32 = arith.constant 4 : i32
    %c8_i32_31 = arith.constant 8 : i32
    %115 = arith.muli %c4_i32, %c8_i32_31 : i32
    %116 = tpu.assume_multiple %115, 8 : i32
    %117 = arith.index_cast %116 : i32 to index
    %c0_32 = arith.constant 0 : index
    %118 = vector.load %arg11[%117, %c0_32] : memref<64x128xf32, #tpu.memory_space<vmem>>, vector<8x128xf32>
    %119 = arith.truncf %111 : vector<8x32xf32> to vector<8x32xbf16>
    %cst_33 = arith.constant dense<0.000000e+00> : vector<8x128xf32>
    %120 = tpu.matmul %119, %8, %cst_33 {dimension_numbers = #tpu.dot_dimension_numbers<[1], [0], [0], [1], [0, 0, 1, 1], [], []>} : vector<8x32xbf16>, vector<32x128xbf16>, vector<8x128xf32> -> vector<8x128xf32>
    %121 = arith.addf %118, %120 : vector<8x128xf32>
    %122 = vector.extract_strided_slice %121 {offsets = [0, 0], sizes = [8, 96], strides = [1, 1]} : vector<8x128xf32> to vector<8x96xf32>
    %123 = arith.negf %122 : vector<8x96xf32>
    %124 = math.exp %123 : vector<8x96xf32>
    %cst_34 = arith.constant 1.000000e+00 : f32
    %125 = vector.broadcast %cst_34 : f32 to vector<8x96xf32>
    %126 = arith.addf %125, %124 : vector<8x96xf32>
    %127 = arith.divf %125, %126 : vector<8x96xf32>
    %128 = vector.extract_strided_slice %121 {offsets = [0, 96], sizes = [8, 32], strides = [1, 1]} : vector<8x128xf32> to vector<8x32xf32>
    %129 = math.tanh %128 : vector<8x32xf32>
    %130 = vector.extract_strided_slice %127 {offsets = [0, 32], sizes = [8, 32], strides = [1, 1]} : vector<8x96xf32> to vector<8x32xf32>
    %131 = arith.mulf %130, %108 : vector<8x32xf32>
    %132 = vector.extract_strided_slice %127 {offsets = [0, 0], sizes = [8, 32], strides = [1, 1]} : vector<8x96xf32> to vector<8x32xf32>
    %133 = arith.mulf %132, %129 : vector<8x32xf32>
    %134 = arith.addf %131, %133 : vector<8x32xf32>
    %135 = vector.extract_strided_slice %127 {offsets = [0, 64], sizes = [8, 32], strides = [1, 1]} : vector<8x96xf32> to vector<8x32xf32>
    %136 = math.tanh %134 : vector<8x32xf32>
    %137 = arith.mulf %135, %136 : vector<8x32xf32>
    %138 = arith.truncf %137 : vector<8x32xf32> to vector<8x32xbf16>
    %139 = arith.index_cast %116 : i32 to index
    %c0_35 = arith.constant 0 : index
    %140 = vector.load %arg12[%139, %c0_35] : memref<64x32xbf16, #tpu.memory_space<vmem>>, vector<8x32xbf16>
    tpu.vector_store %arg12[%139, %c0_35], %138 {strides = array<i32>} : memref<64x32xbf16, #tpu.memory_space<vmem>>, vector<8x32xbf16>,
    %c5_i32 = arith.constant 5 : i32
    %c8_i32_36 = arith.constant 8 : i32
    %141 = arith.muli %c5_i32, %c8_i32_36 : i32
    %142 = tpu.assume_multiple %141, 8 : i32
    %143 = arith.index_cast %142 : i32 to index
    %c0_37 = arith.constant 0 : index
    %144 = vector.load %arg11[%143, %c0_37] : memref<64x128xf32, #tpu.memory_space<vmem>>, vector<8x128xf32>
    %145 = arith.truncf %137 : vector<8x32xf32> to vector<8x32xbf16>
    %cst_38 = arith.constant dense<0.000000e+00> : vector<8x128xf32>
    %146 = tpu.matmul %145, %8, %cst_38 {dimension_numbers = #tpu.dot_dimension_numbers<[1], [0], [0], [1], [0, 0, 1, 1], [], []>} : vector<8x32xbf16>, vector<32x128xbf16>, vector<8x128xf32> -> vector<8x128xf32>
    %147 = arith.addf %144, %146 : vector<8x128xf32>
    %148 = vector.extract_strided_slice %147 {offsets = [0, 0], sizes = [8, 96], strides = [1, 1]} : vector<8x128xf32> to vector<8x96xf32>
    %149 = arith.negf %148 : vector<8x96xf32>
    %150 = math.exp %149 : vector<8x96xf32>
    %cst_39 = arith.constant 1.000000e+00 : f32
    %151 = vector.broadcast %cst_39 : f32 to vector<8x96xf32>
    %152 = arith.addf %151, %150 : vector<8x96xf32>
    %153 = arith.divf %151, %152 : vector<8x96xf32>
    %154 = vector.extract_strided_slice %147 {offsets = [0, 96], sizes = [8, 32], strides = [1, 1]} : vector<8x128xf32> to vector<8x32xf32>
    %155 = math.tanh %154 : vector<8x32xf32>
    %156 = vector.extract_strided_slice %153 {offsets = [0, 32], sizes = [8, 32], strides = [1, 1]} : vector<8x96xf32> to vector<8x32xf32>
    %157 = arith.mulf %156, %134 : vector<8x32xf32>
    %158 = vector.extract_strided_slice %153 {offsets = [0, 0], sizes = [8, 32], strides = [1, 1]} : vector<8x96xf32> to vector<8x32xf32>
    %159 = arith.mulf %158, %155 : vector<8x32xf32>
    %160 = arith.addf %157, %159 : vector<8x32xf32>
    %161 = vector.extract_strided_slice %153 {offsets = [0, 64], sizes = [8, 32], strides = [1, 1]} : vector<8x96xf32> to vector<8x32xf32>
    %162 = math.tanh %160 : vector<8x32xf32>
    %163 = arith.mulf %161, %162 : vector<8x32xf32>
    %164 = arith.truncf %163 : vector<8x32xf32> to vector<8x32xbf16>
    %165 = arith.index_cast %142 : i32 to index
    %c0_40 = arith.constant 0 : index
    %166 = vector.load %arg12[%165, %c0_40] : memref<64x32xbf16, #tpu.memory_space<vmem>>, vector<8x32xbf16>
    tpu.vector_store %arg12[%165, %c0_40], %164 {strides = array<i32>} : memref<64x32xbf16, #tpu.memory_space<vmem>>, vector<8x32xbf16>,
    %c6_i32 = arith.constant 6 : i32
    %c8_i32_41 = arith.constant 8 : i32
    %167 = arith.muli %c6_i32, %c8_i32_41 : i32
    %168 = tpu.assume_multiple %167, 8 : i32
    %169 = arith.index_cast %168 : i32 to index
    %c0_42 = arith.constant 0 : index
    %170 = vector.load %arg11[%169, %c0_42] : memref<64x128xf32, #tpu.memory_space<vmem>>, vector<8x128xf32>
    %171 = arith.truncf %163 : vector<8x32xf32> to vector<8x32xbf16>
    %cst_43 = arith.constant dense<0.000000e+00> : vector<8x128xf32>
    %172 = tpu.matmul %171, %8, %cst_43 {dimension_numbers = #tpu.dot_dimension_numbers<[1], [0], [0], [1], [0, 0, 1, 1], [], []>} : vector<8x32xbf16>, vector<32x128xbf16>, vector<8x128xf32> -> vector<8x128xf32>
    %173 = arith.addf %170, %172 : vector<8x128xf32>
    %174 = vector.extract_strided_slice %173 {offsets = [0, 0], sizes = [8, 96], strides = [1, 1]} : vector<8x128xf32> to vector<8x96xf32>
    %175 = arith.negf %174 : vector<8x96xf32>
    %176 = math.exp %175 : vector<8x96xf32>
    %cst_44 = arith.constant 1.000000e+00 : f32
    %177 = vector.broadcast %cst_44 : f32 to vector<8x96xf32>
    %178 = arith.addf %177, %176 : vector<8x96xf32>
    %179 = arith.divf %177, %178 : vector<8x96xf32>
    %180 = vector.extract_strided_slice %173 {offsets = [0, 96], sizes = [8, 32], strides = [1, 1]} : vector<8x128xf32> to vector<8x32xf32>
    %181 = math.tanh %180 : vector<8x32xf32>
    %182 = vector.extract_strided_slice %179 {offsets = [0, 32], sizes = [8, 32], strides = [1, 1]} : vector<8x96xf32> to vector<8x32xf32>
    %183 = arith.mulf %182, %160 : vector<8x32xf32>
    %184 = vector.extract_strided_slice %179 {offsets = [0, 0], sizes = [8, 32], strides = [1, 1]} : vector<8x96xf32> to vector<8x32xf32>
    %185 = arith.mulf %184, %181 : vector<8x32xf32>
    %186 = arith.addf %183, %185 : vector<8x32xf32>
    %187 = vector.extract_strided_slice %179 {offsets = [0, 64], sizes = [8, 32], strides = [1, 1]} : vector<8x96xf32> to vector<8x32xf32>
    %188 = math.tanh %186 : vector<8x32xf32>
    %189 = arith.mulf %187, %188 : vector<8x32xf32>
    %190 = arith.truncf %189 : vector<8x32xf32> to vector<8x32xbf16>
    %191 = arith.index_cast %168 : i32 to index
    %c0_45 = arith.constant 0 : index
    %192 = vector.load %arg12[%191, %c0_45] : memref<64x32xbf16, #tpu.memory_space<vmem>>, vector<8x32xbf16>
    tpu.vector_store %arg12[%191, %c0_45], %190 {strides = array<i32>} : memref<64x32xbf16, #tpu.memory_space<vmem>>, vector<8x32xbf16>,
    %c7_i32 = arith.constant 7 : i32
    %c8_i32_46 = arith.constant 8 : i32
    %193 = arith.muli %c7_i32, %c8_i32_46 : i32
    %194 = tpu.assume_multiple %193, 8 : i32
    %195 = arith.index_cast %194 : i32 to index
    %c0_47 = arith.constant 0 : index
    %196 = vector.load %arg11[%195, %c0_47] : memref<64x128xf32, #tpu.memory_space<vmem>>, vector<8x128xf32>
    %197 = arith.truncf %189 : vector<8x32xf32> to vector<8x32xbf16>
    %cst_48 = arith.constant dense<0.000000e+00> : vector<8x128xf32>
    %198 = tpu.matmul %197, %8, %cst_48 {dimension_numbers = #tpu.dot_dimension_numbers<[1], [0], [0], [1], [0, 0, 1, 1], [], []>} : vector<8x32xbf16>, vector<32x128xbf16>, vector<8x128xf32> -> vector<8x128xf32>
    %199 = arith.addf %196, %198 : vector<8x128xf32>
    %200 = vector.extract_strided_slice %199 {offsets = [0, 0], sizes = [8, 96], strides = [1, 1]} : vector<8x128xf32> to vector<8x96xf32>
    %201 = arith.negf %200 : vector<8x96xf32>
    %202 = math.exp %201 : vector<8x96xf32>
    %cst_49 = arith.constant 1.000000e+00 : f32
    %203 = vector.broadcast %cst_49 : f32 to vector<8x96xf32>
    %204 = arith.addf %203, %202 : vector<8x96xf32>
    %205 = arith.divf %203, %204 : vector<8x96xf32>
    %206 = vector.extract_strided_slice %199 {offsets = [0, 96], sizes = [8, 32], strides = [1, 1]} : vector<8x128xf32> to vector<8x32xf32>
    %207 = math.tanh %206 : vector<8x32xf32>
    %208 = vector.extract_strided_slice %205 {offsets = [0, 32], sizes = [8, 32], strides = [1, 1]} : vector<8x96xf32> to vector<8x32xf32>
    %209 = arith.mulf %208, %186 : vector<8x32xf32>
    %210 = vector.extract_strided_slice %205 {offsets = [0, 0], sizes = [8, 32], strides = [1, 1]} : vector<8x96xf32> to vector<8x32xf32>
    %211 = arith.mulf %210, %207 : vector<8x32xf32>
    %212 = arith.addf %209, %211 : vector<8x32xf32>
    %213 = vector.extract_strided_slice %205 {offsets = [0, 64], sizes = [8, 32], strides = [1, 1]} : vector<8x96xf32> to vector<8x32xf32>
    %214 = math.tanh %212 : vector<8x32xf32>
    %215 = arith.mulf %213, %214 : vector<8x32xf32>
    %216 = arith.truncf %215 : vector<8x32xf32> to vector<8x32xbf16>
    %217 = arith.index_cast %194 : i32 to index
    %c0_50 = arith.constant 0 : index
    %218 = vector.load %arg12[%217, %c0_50] : memref<64x32xbf16, #tpu.memory_space<vmem>>, vector<8x32xbf16>
    tpu.vector_store %arg12[%217, %c0_50], %216 {strides = array<i32>} : memref<64x32xbf16, #tpu.memory_space<vmem>>, vector<8x32xbf16>,
    %c8_i32_51 = arith.constant 8 : i32
    %c0_52 = arith.constant 0 : index
    %c0_53 = arith.constant 0 : index
    %219 = vector.load %arg12[%c0_52, %c0_53] : memref<64x32xbf16, #tpu.memory_space<vmem>>, vector<64x32xbf16>
    %c0_54 = arith.constant 0 : index
    %c0_55 = arith.constant 0 : index
    %220 = vector.load %arg5[%c0_54, %c0_55] : memref<32x128xbf16, #tpu.memory_space<vmem>>, vector<32x128xbf16>
    %cst_56 = arith.constant dense<0.000000e+00> : vector<64x128xf32>
    %221 = tpu.matmul %219, %220, %cst_56 {dimension_numbers = #tpu.dot_dimension_numbers<[1], [0], [0], [1], [0, 0, 1, 1], [], []>} : vector<64x32xbf16>, vector<32x128xbf16>, vector<64x128xf32> -> vector<64x128xf32>
    %c0_57 = arith.constant 0 : index
    %c0_58 = arith.constant 0 : index
    %222 = vector.load %arg7[%c0_57, %c0_58] : memref<1x128xf32, #tpu.memory_space<vmem>>, vector<1x128xf32>
    %223 = vector.broadcast %222 : vector<1x128xf32> to vector<64x128xf32>
    %224 = arith.addf %221, %223 : vector<64x128xf32>
    %c0_59 = arith.constant 0 : index
    %c0_60 = arith.constant 0 : index
    %225 = vector.load %arg11[%c0_59, %c0_60] : memref<64x128xf32, #tpu.memory_space<vmem>>, vector<64x128xf32>
    tpu.vector_store %arg11[%c0_59, %c0_60], %224 {strides = array<i32>} : memref<64x128xf32, #tpu.memory_space<vmem>>, vector<64x128xf32>,
    %c0_61 = arith.constant 0 : index
    %c0_62 = arith.constant 0 : index
    %226 = vector.load %arg6[%c0_61, %c0_62] : memref<32x128xbf16, #tpu.memory_space<vmem>>, vector<32x128xbf16>
    %cst_63 = arith.constant 0.000000e+00 : f32
    %227 = vector.broadcast %cst_63 : f32 to vector<8x32xf32>
    %cst_64 = arith.constant 0.000000e+00 : f32
    %228 = vector.broadcast %cst_64 : f32 to vector<8x32xf32>
    %c0_i32_65 = arith.constant 0 : i32
    %c8_i32_66 = arith.constant 8 : i32
    %229 = arith.muli %c0_i32_65, %c8_i32_66 : i32
    %230 = tpu.assume_multiple %229, 8 : i32
    %231 = arith.index_cast %230 : i32 to index
    %c0_67 = arith.constant 0 : index
    %232 = vector.load %arg11[%231, %c0_67] : memref<64x128xf32, #tpu.memory_space<vmem>>, vector<8x128xf32>
    %233 = arith.truncf %227 : vector<8x32xf32> to vector<8x32xbf16>
    %cst_68 = arith.constant dense<0.000000e+00> : vector<8x128xf32>
    %234 = tpu.matmul %233, %226, %cst_68 {dimension_numbers = #tpu.dot_dimension_numbers<[1], [0], [0], [1], [0, 0, 1, 1], [], []>} : vector<8x32xbf16>, vector<32x128xbf16>, vector<8x128xf32> -> vector<8x128xf32>
    %235 = arith.addf %232, %234 : vector<8x128xf32>
    %236 = vector.extract_strided_slice %235 {offsets = [0, 0], sizes = [8, 96], strides = [1, 1]} : vector<8x128xf32> to vector<8x96xf32>
    %237 = arith.negf %236 : vector<8x96xf32>
    %238 = math.exp %237 : vector<8x96xf32>
    %cst_69 = arith.constant 1.000000e+00 : f32
    %239 = vector.broadcast %cst_69 : f32 to vector<8x96xf32>
    %240 = arith.addf %239, %238 : vector<8x96xf32>
    %241 = arith.divf %239, %240 : vector<8x96xf32>
    %242 = vector.extract_strided_slice %235 {offsets = [0, 96], sizes = [8, 32], strides = [1, 1]} : vector<8x128xf32> to vector<8x32xf32>
    %243 = math.tanh %242 : vector<8x32xf32>
    %244 = vector.extract_strided_slice %241 {offsets = [0, 32], sizes = [8, 32], strides = [1, 1]} : vector<8x96xf32> to vector<8x32xf32>
    %245 = arith.mulf %244, %228 : vector<8x32xf32>
    %246 = vector.extract_strided_slice %241 {offsets = [0, 0], sizes = [8, 32], strides = [1, 1]} : vector<8x96xf32> to vector<8x32xf32>
    %247 = arith.mulf %246, %243 : vector<8x32xf32>
    %248 = arith.addf %245, %247 : vector<8x32xf32>
    %249 = vector.extract_strided_slice %241 {offsets = [0, 64], sizes = [8, 32], strides = [1, 1]} : vector<8x96xf32> to vector<8x32xf32>
    %250 = math.tanh %248 : vector<8x32xf32>
    %251 = arith.mulf %249, %250 : vector<8x32xf32>
    %c1_i32_70 = arith.constant 1 : i32
    %c8_i32_71 = arith.constant 8 : i32
    %252 = arith.muli %c1_i32_70, %c8_i32_71 : i32
    %253 = tpu.assume_multiple %252, 8 : i32
    %254 = arith.index_cast %253 : i32 to index
    %c0_72 = arith.constant 0 : index
    %255 = vector.load %arg11[%254, %c0_72] : memref<64x128xf32, #tpu.memory_space<vmem>>, vector<8x128xf32>
    %256 = arith.truncf %251 : vector<8x32xf32> to vector<8x32xbf16>
    %cst_73 = arith.constant dense<0.000000e+00> : vector<8x128xf32>
    %257 = tpu.matmul %256, %226, %cst_73 {dimension_numbers = #tpu.dot_dimension_numbers<[1], [0], [0], [1], [0, 0, 1, 1], [], []>} : vector<8x32xbf16>, vector<32x128xbf16>, vector<8x128xf32> -> vector<8x128xf32>
    %258 = arith.addf %255, %257 : vector<8x128xf32>
    %259 = vector.extract_strided_slice %258 {offsets = [0, 0], sizes = [8, 96], strides = [1, 1]} : vector<8x128xf32> to vector<8x96xf32>
    %260 = arith.negf %259 : vector<8x96xf32>
    %261 = math.exp %260 : vector<8x96xf32>
    %cst_74 = arith.constant 1.000000e+00 : f32
    %262 = vector.broadcast %cst_74 : f32 to vector<8x96xf32>
    %263 = arith.addf %262, %261 : vector<8x96xf32>
    %264 = arith.divf %262, %263 : vector<8x96xf32>
    %265 = vector.extract_strided_slice %258 {offsets = [0, 96], sizes = [8, 32], strides = [1, 1]} : vector<8x128xf32> to vector<8x32xf32>
    %266 = math.tanh %265 : vector<8x32xf32>
    %267 = vector.extract_strided_slice %264 {offsets = [0, 32], sizes = [8, 32], strides = [1, 1]} : vector<8x96xf32> to vector<8x32xf32>
    %268 = arith.mulf %267, %248 : vector<8x32xf32>
    %269 = vector.extract_strided_slice %264 {offsets = [0, 0], sizes = [8, 32], strides = [1, 1]} : vector<8x96xf32> to vector<8x32xf32>
    %270 = arith.mulf %269, %266 : vector<8x32xf32>
    %271 = arith.addf %268, %270 : vector<8x32xf32>
    %272 = vector.extract_strided_slice %264 {offsets = [0, 64], sizes = [8, 32], strides = [1, 1]} : vector<8x96xf32> to vector<8x32xf32>
    %273 = math.tanh %271 : vector<8x32xf32>
    %274 = arith.mulf %272, %273 : vector<8x32xf32>
    %c2_i32_75 = arith.constant 2 : i32
    %c8_i32_76 = arith.constant 8 : i32
    %275 = arith.muli %c2_i32_75, %c8_i32_76 : i32
    %276 = tpu.assume_multiple %275, 8 : i32
    %277 = arith.index_cast %276 : i32 to index
    %c0_77 = arith.constant 0 : index
    %278 = vector.load %arg11[%277, %c0_77] : memref<64x128xf32, #tpu.memory_space<vmem>>, vector<8x128xf32>
    %279 = arith.truncf %274 : vector<8x32xf32> to vector<8x32xbf16>
    %cst_78 = arith.constant dense<0.000000e+00> : vector<8x128xf32>
    %280 = tpu.matmul %279, %226, %cst_78 {dimension_numbers = #tpu.dot_dimension_numbers<[1], [0], [0], [1], [0, 0, 1, 1], [], []>} : vector<8x32xbf16>, vector<32x128xbf16>, vector<8x128xf32> -> vector<8x128xf32>
    %281 = arith.addf %278, %280 : vector<8x128xf32>
    %282 = vector.extract_strided_slice %281 {offsets = [0, 0], sizes = [8, 96], strides = [1, 1]} : vector<8x128xf32> to vector<8x96xf32>
    %283 = arith.negf %282 : vector<8x96xf32>
    %284 = math.exp %283 : vector<8x96xf32>
    %cst_79 = arith.constant 1.000000e+00 : f32
    %285 = vector.broadcast %cst_79 : f32 to vector<8x96xf32>
    %286 = arith.addf %285, %284 : vector<8x96xf32>
    %287 = arith.divf %285, %286 : vector<8x96xf32>
    %288 = vector.extract_strided_slice %281 {offsets = [0, 96], sizes = [8, 32], strides = [1, 1]} : vector<8x128xf32> to vector<8x32xf32>
    %289 = math.tanh %288 : vector<8x32xf32>
    %290 = vector.extract_strided_slice %287 {offsets = [0, 32], sizes = [8, 32], strides = [1, 1]} : vector<8x96xf32> to vector<8x32xf32>
    %291 = arith.mulf %290, %271 : vector<8x32xf32>
    %292 = vector.extract_strided_slice %287 {offsets = [0, 0], sizes = [8, 32], strides = [1, 1]} : vector<8x96xf32> to vector<8x32xf32>
    %293 = arith.mulf %292, %289 : vector<8x32xf32>
    %294 = arith.addf %291, %293 : vector<8x32xf32>
    %295 = vector.extract_strided_slice %287 {offsets = [0, 64], sizes = [8, 32], strides = [1, 1]} : vector<8x96xf32> to vector<8x32xf32>
    %296 = math.tanh %294 : vector<8x32xf32>
    %297 = arith.mulf %295, %296 : vector<8x32xf32>
    %c3_i32_80 = arith.constant 3 : i32
    %c8_i32_81 = arith.constant 8 : i32
    %298 = arith.muli %c3_i32_80, %c8_i32_81 : i32
    %299 = tpu.assume_multiple %298, 8 : i32
    %300 = arith.index_cast %299 : i32 to index
    %c0_82 = arith.constant 0 : index
    %301 = vector.load %arg11[%300, %c0_82] : memref<64x128xf32, #tpu.memory_space<vmem>>, vector<8x128xf32>
    %302 = arith.truncf %297 : vector<8x32xf32> to vector<8x32xbf16>
    %cst_83 = arith.constant dense<0.000000e+00> : vector<8x128xf32>
    %303 = tpu.matmul %302, %226, %cst_83 {dimension_numbers = #tpu.dot_dimension_numbers<[1], [0], [0], [1], [0, 0, 1, 1], [], []>} : vector<8x32xbf16>, vector<32x128xbf16>, vector<8x128xf32> -> vector<8x128xf32>
    %304 = arith.addf %301, %303 : vector<8x128xf32>
    %305 = vector.extract_strided_slice %304 {offsets = [0, 0], sizes = [8, 96], strides = [1, 1]} : vector<8x128xf32> to vector<8x96xf32>
    %306 = arith.negf %305 : vector<8x96xf32>
    %307 = math.exp %306 : vector<8x96xf32>
    %cst_84 = arith.constant 1.000000e+00 : f32
    %308 = vector.broadcast %cst_84 : f32 to vector<8x96xf32>
    %309 = arith.addf %308, %307 : vector<8x96xf32>
    %310 = arith.divf %308, %309 : vector<8x96xf32>
    %311 = vector.extract_strided_slice %304 {offsets = [0, 96], sizes = [8, 32], strides = [1, 1]} : vector<8x128xf32> to vector<8x32xf32>
    %312 = math.tanh %311 : vector<8x32xf32>
    %313 = vector.extract_strided_slice %310 {offsets = [0, 32], sizes = [8, 32], strides = [1, 1]} : vector<8x96xf32> to vector<8x32xf32>
    %314 = arith.mulf %313, %294 : vector<8x32xf32>
    %315 = vector.extract_strided_slice %310 {offsets = [0, 0], sizes = [8, 32], strides = [1, 1]} : vector<8x96xf32> to vector<8x32xf32>
    %316 = arith.mulf %315, %312 : vector<8x32xf32>
    %317 = arith.addf %314, %316 : vector<8x32xf32>
    %318 = vector.extract_strided_slice %310 {offsets = [0, 64], sizes = [8, 32], strides = [1, 1]} : vector<8x96xf32> to vector<8x32xf32>
    %319 = math.tanh %317 : vector<8x32xf32>
    %320 = arith.mulf %318, %319 : vector<8x32xf32>
    %c4_i32_85 = arith.constant 4 : i32
    %c8_i32_86 = arith.constant 8 : i32
    %321 = arith.muli %c4_i32_85, %c8_i32_86 : i32
    %322 = tpu.assume_multiple %321, 8 : i32
    %323 = arith.index_cast %322 : i32 to index
    %c0_87 = arith.constant 0 : index
    %324 = vector.load %arg11[%323, %c0_87] : memref<64x128xf32, #tpu.memory_space<vmem>>, vector<8x128xf32>
    %325 = arith.truncf %320 : vector<8x32xf32> to vector<8x32xbf16>
    %cst_88 = arith.constant dense<0.000000e+00> : vector<8x128xf32>
    %326 = tpu.matmul %325, %226, %cst_88 {dimension_numbers = #tpu.dot_dimension_numbers<[1], [0], [0], [1], [0, 0, 1, 1], [], []>} : vector<8x32xbf16>, vector<32x128xbf16>, vector<8x128xf32> -> vector<8x128xf32>
    %327 = arith.addf %324, %326 : vector<8x128xf32>
    %328 = vector.extract_strided_slice %327 {offsets = [0, 0], sizes = [8, 96], strides = [1, 1]} : vector<8x128xf32> to vector<8x96xf32>
    %329 = arith.negf %328 : vector<8x96xf32>
    %330 = math.exp %329 : vector<8x96xf32>
    %cst_89 = arith.constant 1.000000e+00 : f32
    %331 = vector.broadcast %cst_89 : f32 to vector<8x96xf32>
    %332 = arith.addf %331, %330 : vector<8x96xf32>
    %333 = arith.divf %331, %332 : vector<8x96xf32>
    %334 = vector.extract_strided_slice %327 {offsets = [0, 96], sizes = [8, 32], strides = [1, 1]} : vector<8x128xf32> to vector<8x32xf32>
    %335 = math.tanh %334 : vector<8x32xf32>
    %336 = vector.extract_strided_slice %333 {offsets = [0, 32], sizes = [8, 32], strides = [1, 1]} : vector<8x96xf32> to vector<8x32xf32>
    %337 = arith.mulf %336, %317 : vector<8x32xf32>
    %338 = vector.extract_strided_slice %333 {offsets = [0, 0], sizes = [8, 32], strides = [1, 1]} : vector<8x96xf32> to vector<8x32xf32>
    %339 = arith.mulf %338, %335 : vector<8x32xf32>
    %340 = arith.addf %337, %339 : vector<8x32xf32>
    %341 = vector.extract_strided_slice %333 {offsets = [0, 64], sizes = [8, 32], strides = [1, 1]} : vector<8x96xf32> to vector<8x32xf32>
    %342 = math.tanh %340 : vector<8x32xf32>
    %343 = arith.mulf %341, %342 : vector<8x32xf32>
    %c5_i32_90 = arith.constant 5 : i32
    %c8_i32_91 = arith.constant 8 : i32
    %344 = arith.muli %c5_i32_90, %c8_i32_91 : i32
    %345 = tpu.assume_multiple %344, 8 : i32
    %346 = arith.index_cast %345 : i32 to index
    %c0_92 = arith.constant 0 : index
    %347 = vector.load %arg11[%346, %c0_92] : memref<64x128xf32, #tpu.memory_space<vmem>>, vector<8x128xf32>
    %348 = arith.truncf %343 : vector<8x32xf32> to vector<8x32xbf16>
    %cst_93 = arith.constant dense<0.000000e+00> : vector<8x128xf32>
    %349 = tpu.matmul %348, %226, %cst_93 {dimension_numbers = #tpu.dot_dimension_numbers<[1], [0], [0], [1], [0, 0, 1, 1], [], []>} : vector<8x32xbf16>, vector<32x128xbf16>, vector<8x128xf32> -> vector<8x128xf32>
    %350 = arith.addf %347, %349 : vector<8x128xf32>
    %351 = vector.extract_strided_slice %350 {offsets = [0, 0], sizes = [8, 96], strides = [1, 1]} : vector<8x128xf32> to vector<8x96xf32>
    %352 = arith.negf %351 : vector<8x96xf32>
    %353 = math.exp %352 : vector<8x96xf32>
    %cst_94 = arith.constant 1.000000e+00 : f32
    %354 = vector.broadcast %cst_94 : f32 to vector<8x96xf32>
    %355 = arith.addf %354, %353 : vector<8x96xf32>
    %356 = arith.divf %354, %355 : vector<8x96xf32>
    %357 = vector.extract_strided_slice %350 {offsets = [0, 96], sizes = [8, 32], strides = [1, 1]} : vector<8x128xf32> to vector<8x32xf32>
    %358 = math.tanh %357 : vector<8x32xf32>
    %359 = vector.extract_strided_slice %356 {offsets = [0, 32], sizes = [8, 32], strides = [1, 1]} : vector<8x96xf32> to vector<8x32xf32>
    %360 = arith.mulf %359, %340 : vector<8x32xf32>
    %361 = vector.extract_strided_slice %356 {offsets = [0, 0], sizes = [8, 32], strides = [1, 1]} : vector<8x96xf32> to vector<8x32xf32>
    %362 = arith.mulf %361, %358 : vector<8x32xf32>
    %363 = arith.addf %360, %362 : vector<8x32xf32>
    %364 = vector.extract_strided_slice %356 {offsets = [0, 64], sizes = [8, 32], strides = [1, 1]} : vector<8x96xf32> to vector<8x32xf32>
    %365 = math.tanh %363 : vector<8x32xf32>
    %366 = arith.mulf %364, %365 : vector<8x32xf32>
    %c6_i32_95 = arith.constant 6 : i32
    %c8_i32_96 = arith.constant 8 : i32
    %367 = arith.muli %c6_i32_95, %c8_i32_96 : i32
    %368 = tpu.assume_multiple %367, 8 : i32
    %369 = arith.index_cast %368 : i32 to index
    %c0_97 = arith.constant 0 : index
    %370 = vector.load %arg11[%369, %c0_97] : memref<64x128xf32, #tpu.memory_space<vmem>>, vector<8x128xf32>
    %371 = arith.truncf %366 : vector<8x32xf32> to vector<8x32xbf16>
    %cst_98 = arith.constant dense<0.000000e+00> : vector<8x128xf32>
    %372 = tpu.matmul %371, %226, %cst_98 {dimension_numbers = #tpu.dot_dimension_numbers<[1], [0], [0], [1], [0, 0, 1, 1], [], []>} : vector<8x32xbf16>, vector<32x128xbf16>, vector<8x128xf32> -> vector<8x128xf32>
    %373 = arith.addf %370, %372 : vector<8x128xf32>
    %374 = vector.extract_strided_slice %373 {offsets = [0, 0], sizes = [8, 96], strides = [1, 1]} : vector<8x128xf32> to vector<8x96xf32>
    %375 = arith.negf %374 : vector<8x96xf32>
    %376 = math.exp %375 : vector<8x96xf32>
    %cst_99 = arith.constant 1.000000e+00 : f32
    %377 = vector.broadcast %cst_99 : f32 to vector<8x96xf32>
    %378 = arith.addf %377, %376 : vector<8x96xf32>
    %379 = arith.divf %377, %378 : vector<8x96xf32>
    %380 = vector.extract_strided_slice %373 {offsets = [0, 96], sizes = [8, 32], strides = [1, 1]} : vector<8x128xf32> to vector<8x32xf32>
    %381 = math.tanh %380 : vector<8x32xf32>
    %382 = vector.extract_strided_slice %379 {offsets = [0, 32], sizes = [8, 32], strides = [1, 1]} : vector<8x96xf32> to vector<8x32xf32>
    %383 = arith.mulf %382, %363 : vector<8x32xf32>
    %384 = vector.extract_strided_slice %379 {offsets = [0, 0], sizes = [8, 32], strides = [1, 1]} : vector<8x96xf32> to vector<8x32xf32>
    %385 = arith.mulf %384, %381 : vector<8x32xf32>
    %386 = arith.addf %383, %385 : vector<8x32xf32>
    %387 = vector.extract_strided_slice %379 {offsets = [0, 64], sizes = [8, 32], strides = [1, 1]} : vector<8x96xf32> to vector<8x32xf32>
    %388 = math.tanh %386 : vector<8x32xf32>
    %389 = arith.mulf %387, %388 : vector<8x32xf32>
    %c7_i32_100 = arith.constant 7 : i32
    %c8_i32_101 = arith.constant 8 : i32
    %390 = arith.muli %c7_i32_100, %c8_i32_101 : i32
    %391 = tpu.assume_multiple %390, 8 : i32
    %392 = arith.index_cast %391 : i32 to index
    %c0_102 = arith.constant 0 : index
    %393 = vector.load %arg11[%392, %c0_102] : memref<64x128xf32, #tpu.memory_space<vmem>>, vector<8x128xf32>
    %394 = arith.truncf %389 : vector<8x32xf32> to vector<8x32xbf16>
    %cst_103 = arith.constant dense<0.000000e+00> : vector<8x128xf32>
    %395 = tpu.matmul %394, %226, %cst_103 {dimension_numbers = #tpu.dot_dimension_numbers<[1], [0], [0], [1], [0, 0, 1, 1], [], []>} : vector<8x32xbf16>, vector<32x128xbf16>, vector<8x128xf32> -> vector<8x128xf32>
    %396 = arith.addf %393, %395 : vector<8x128xf32>
    %397 = vector.extract_strided_slice %396 {offsets = [0, 0], sizes = [8, 96], strides = [1, 1]} : vector<8x128xf32> to vector<8x96xf32>
    %398 = arith.negf %397 : vector<8x96xf32>
    %399 = math.exp %398 : vector<8x96xf32>
    %cst_104 = arith.constant 1.000000e+00 : f32
    %400 = vector.broadcast %cst_104 : f32 to vector<8x96xf32>
    %401 = arith.addf %400, %399 : vector<8x96xf32>
    %402 = arith.divf %400, %401 : vector<8x96xf32>
    %403 = vector.extract_strided_slice %396 {offsets = [0, 96], sizes = [8, 32], strides = [1, 1]} : vector<8x128xf32> to vector<8x32xf32>
    %404 = math.tanh %403 : vector<8x32xf32>
    %405 = vector.extract_strided_slice %402 {offsets = [0, 32], sizes = [8, 32], strides = [1, 1]} : vector<8x96xf32> to vector<8x32xf32>
    %406 = arith.mulf %405, %386 : vector<8x32xf32>
    %407 = vector.extract_strided_slice %402 {offsets = [0, 0], sizes = [8, 32], strides = [1, 1]} : vector<8x96xf32> to vector<8x32xf32>
    %408 = arith.mulf %407, %404 : vector<8x32xf32>
    %409 = arith.addf %406, %408 : vector<8x32xf32>
    %410 = vector.extract_strided_slice %402 {offsets = [0, 64], sizes = [8, 32], strides = [1, 1]} : vector<8x96xf32> to vector<8x32xf32>
    %411 = math.tanh %409 : vector<8x32xf32>
    %412 = arith.mulf %410, %411 : vector<8x32xf32>
    %c8_i32_105 = arith.constant 8 : i32
    %c0_106 = arith.constant 0 : index
    %c0_107 = arith.constant 0 : index
    %413 = vector.load %arg8[%c0_106, %c0_107] : memref<32x1xf32, #tpu.memory_space<vmem>>, vector<32x1xf32>
    %cst_108 = arith.constant dense<0.000000e+00> : vector<8x1xf32>
    %414 = tpu.matmul %412, %413, %cst_108 {dimension_numbers = #tpu.dot_dimension_numbers<[1], [0], [0], [1], [0, 0, 1, 1], [], []>} : vector<8x32xf32>, vector<32x1xf32>, vector<8x1xf32> -> vector<8x1xf32>
    %c0_109 = arith.constant 0 : index
    %c0_110 = arith.constant 0 : index
    %415 = vector.load %arg9[%c0_109, %c0_110] : memref<1x1xf32, #tpu.memory_space<vmem>>, vector<1x1xf32>
    %416 = vector.broadcast %415 : vector<1x1xf32> to vector<8x1xf32>
    %417 = arith.addf %414, %416 : vector<8x1xf32>
    %c0_111 = arith.constant 0 : index
    %c0_112 = arith.constant 0 : index
    %c0_113 = arith.constant 0 : index
    %418 = vector.load %arg10[%c0_111, %c0_112, %c0_113] : memref<1x8x1xf32, #tpu.memory_space<vmem>>, vector<1x8x1xf32>
    %419 = vector.shape_cast %418 : vector<1x8x1xf32> to vector<8x1xf32>
    %420 = vector.shape_cast %417 : vector<8x1xf32> to vector<1x8x1xf32>
    tpu.vector_store %arg10[%c0_111, %c0_112, %c0_113], %420 {strides = array<i32>} : memref<1x8x1xf32, #tpu.memory_space<vmem>>, vector<1x8x1xf32>,
    return
  }
  func.func @transform_0(%arg0: i32) -> (i32, i32, i32) {
    %c0_i32 = arith.constant 0 : i32
    %c0_i32_0 = arith.constant 0 : i32
    %c0_i32_1 = arith.constant 0 : i32
    return %arg0, %c0_i32, %c0_i32_0 : i32, i32, i32
  }
  func.func @transform_1(%arg0: i32) -> (i32, i32) {
    %c0_i32 = arith.constant 0 : i32
    %c0_i32_0 = arith.constant 0 : i32
    %c0_i32_1 = arith.constant 0 : i32
    return %c0_i32, %c0_i32_0 : i32, i32
  }
  func.func @transform_2(%arg0: i32) -> (i32, i32) {
    %c0_i32 = arith.constant 0 : i32
    %c0_i32_0 = arith.constant 0 : i32
    %c0_i32_1 = arith.constant 0 : i32
    return %c0_i32, %c0_i32_0 : i32, i32
  }
  func.func @transform_3(%arg0: i32) -> (i32, i32) {
    %c0_i32 = arith.constant 0 : i32
    %c0_i32_0 = arith.constant 0 : i32
    %c0_i32_1 = arith.constant 0 : i32
    return %c0_i32, %c0_i32_0 : i32, i32
  }
  func.func @transform_4(%arg0: i32) -> (i32, i32) {
    %c0_i32 = arith.constant 0 : i32
    %c0_i32_0 = arith.constant 0 : i32
    %c0_i32_1 = arith.constant 0 : i32
    return %c0_i32, %c0_i32_0 : i32, i32
  }
  func.func @transform_5(%arg0: i32) -> (i32, i32) {
    %c0_i32 = arith.constant 0 : i32
    %c0_i32_0 = arith.constant 0 : i32
    %c0_i32_1 = arith.constant 0 : i32
    return %c0_i32, %c0_i32_0 : i32, i32
  }
  func.func @transform_6(%arg0: i32) -> (i32, i32) {
    %c0_i32 = arith.constant 0 : i32
    %c0_i32_0 = arith.constant 0 : i32
    %c0_i32_1 = arith.constant 0 : i32
    return %c0_i32, %c0_i32_0 : i32, i32
  }
  func.func @transform_7(%arg0: i32) -> (i32, i32) {
    %c0_i32 = arith.constant 0 : i32
    %c0_i32_0 = arith.constant 0 : i32
    %c0_i32_1 = arith.constant 0 : i32
    return %c0_i32, %c0_i32_0 : i32, i32
  }
  func.func @transform_8(%arg0: i32) -> (i32, i32) {
    %c0_i32 = arith.constant 0 : i32
    %c0_i32_0 = arith.constant 0 : i32
    %c0_i32_1 = arith.constant 0 : i32
    return %c0_i32, %c0_i32_0 : i32, i32
  }
  func.func @transform_9(%arg0: i32) -> (i32, i32, i32) {
    %c0_i32 = arith.constant 0 : i32
    %c0_i32_0 = arith.constant 0 : i32
    %c0_i32_1 = arith.constant 0 : i32
    return %arg0, %c0_i32, %c0_i32_0 : i32, i32, i32
  }
}

</mosaic_0001>

<llo_original>
// kernel: tpu_custom_call.1
$region0: #{tpu_custom_call.1}
  #allocation0 [shape = 'u32[]', space=smem, size = 0x4, offset = 0x4, fixed_abs, tag = 'smem constant byte address 0x4 - core index']
  #allocation1 [shape = 'u32[72,128]{1,0:T(1,128)}', space=vmem, size = 0x9000, scoped, tag = 'internal scratch']
  #allocation2 [shape = 'f32[64,128]{1,0:T(8,128)}', space=vmem, size = 0x8000, scoped, tag = 'scratch operand']
  #allocation3 [shape = 'bf16[64,32]{1,0:T(8,128)(2,1)}', space=vmem, size = 0x4000, scoped, tag = 'scratch operand']
  #allocation4 [shape = 'f32[1,1]{1,0:T(1,128)S(1)}', space=vmem, size = 0x200, scoped, tag = 'scoped memory for tpu_custom_call.1']
  %s0 = inlined_call_operand.vmem [shape: bf16[1,64,4], index: 0, kind: input, shape index: {}]
  %s1 = inlined_call_operand.vmem [shape: bf16[4,128], index: 1, kind: input, shape index: {}]
  %s2 = inlined_call_operand.vmem [shape: bf16[32,128], index: 2, kind: input, shape index: {}]
  %s3 = inlined_call_operand.vmem [shape: f32[1,128], index: 3, kind: input, shape index: {}]
  %s4 = inlined_call_operand.vmem [shape: bf16[32,128], index: 4, kind: input, shape index: {}]
  %s5 = inlined_call_operand.vmem [shape: bf16[32,128], index: 5, kind: input, shape index: {}]
  %s6 = inlined_call_operand.vmem [shape: f32[1,128], index: 6, kind: input, shape index: {}]
  %s7 = inlined_call_operand.vmem [shape: f32[32,1], index: 7, kind: input, shape index: {}]
  %s8 = inlined_call_operand.<no memory space> [shape: f32[1,1], index: 8, kind: input, shape index: {}]
  %s9 = inlined_call_operand.vmem [shape: f32[1,8,1], index: 9, kind: output, shape index: {}]
  %s10 = sld [smem:[#allocation0]]
  $region46: #{tpu_custom_call.1} parent=0
    _
  %s12 = ssub.s32 1, %s10
  %s13 = scalar_select 0, %s12, %s10
  %v14 = vstv %s8
  %15 = vst [vmem:[#allocation4] sm:$0x1] %v14
  // Predicated region
  $region2: #{tpu_custom_call.1} parent=0 // pred_check
    _
  $region3: #{tpu_custom_call.1} parent=0 // pred_check_branch
    %17 = sbr.rel (0) target = $region5
  $region4: #{tpu_custom_call.1} parent=0 // pred_region
    _
  $region5: #{tpu_custom_call.1} parent=0 // pred_fallthru
    _
  // Predicated region
  $region6: #{tpu_custom_call.1} parent=0 // pred_check
    _
  $region7: #{tpu_custom_call.1} parent=0 // pred_check_branch
    %19 = sbr.rel (0) target = $region9
  $region8: #{tpu_custom_call.1} parent=0 // pred_region
    _
  $region9: #{tpu_custom_call.1} parent=0 // pred_fallthru
    _
  // Predicated region
  $region10: #{tpu_custom_call.1} parent=0 // pred_check
    _
  $region11: #{tpu_custom_call.1} parent=0 // pred_check_branch
    %21 = sbr.rel (0) target = $region13
  $region12: #{tpu_custom_call.1} parent=0 // pred_region
    _
  $region13: #{tpu_custom_call.1} parent=0 // pred_fallthru
    _
  // Predicated region
  $region14: #{tpu_custom_call.1} parent=0 // pred_check
    _
  $region15: #{tpu_custom_call.1} parent=0 // pred_check_branch
    %23 = sbr.rel (0) target = $region17
  $region16: #{tpu_custom_call.1} parent=0 // pred_region
    _
  $region17: #{tpu_custom_call.1} parent=0 // pred_fallthru
    _
  // Predicated region
  $region18: #{tpu_custom_call.1} parent=0 // pred_check
    _
  $region19: #{tpu_custom_call.1} parent=0 // pred_check_branch
    %25 = sbr.rel (0) target = $region21
  $region20: #{tpu_custom_call.1} parent=0 // pred_region
    _
  $region21: #{tpu_custom_call.1} parent=0 // pred_fallthru
    _
  // Predicated region
  $region22: #{tpu_custom_call.1} parent=0 // pred_check
    _
  $region23: #{tpu_custom_call.1} parent=0 // pred_check_branch
    %27 = sbr.rel (0) target = $region25
  $region24: #{tpu_custom_call.1} parent=0 // pred_region
    _
  $region25: #{tpu_custom_call.1} parent=0 // pred_fallthru
    _
  // Predicated region
  $region26: #{tpu_custom_call.1} parent=0 // pred_check
    _
  $region27: #{tpu_custom_call.1} parent=0 // pred_check_branch
    %29 = sbr.rel (0) target = $region29
  $region28: #{tpu_custom_call.1} parent=0 // pred_region
    _
  $region29: #{tpu_custom_call.1} parent=0 // pred_fallthru
    _
  // Predicated region
  $region30: #{tpu_custom_call.1} parent=0 // pred_check
    _
  $region31: #{tpu_custom_call.1} parent=0 // pred_check_branch
    %31 = sbr.rel (0) target = $region33
  $region32: #{tpu_custom_call.1} parent=0 // pred_region
    _
  $region33: #{tpu_custom_call.1} parent=0 // pred_fallthru
    _
  // Predicated region
  $region34: #{tpu_custom_call.1} parent=0 // pred_check
    _
  $region35: #{tpu_custom_call.1} parent=0 // pred_check_branch
    %33 = sbr.rel (0) target = $region37
  $region36: #{tpu_custom_call.1} parent=0 // pred_region
    _
  $region37: #{tpu_custom_call.1} parent=0 // pred_fallthru
    _
  %v35 = vld [vmem:[%s0] sm:$0xf]
  %v36 = vld [vmem:[%s0 + $0x4] sm:$0xf]
  %v37 = vld [vmem:[%s0 + $0x8] sm:$0xf]
  %v38 = vld [vmem:[%s0 + $0xc] sm:$0xf]
  %v39 = vld [vmem:[%s0 + $0x10] sm:$0xf]
  %v40 = vld [vmem:[%s0 + $0x14] sm:$0xf]
  %v41 = vld [vmem:[%s0 + $0x18] sm:$0xf]
  %v42 = vld [vmem:[%s0 + $0x1c] sm:$0xf]
  %v43 = vld [vmem:[%s1] sm:$0x3]
  %v44 = vld [vmem:[%s3] sm:$0x1]
  %v46 = vperm.slane %v44, 0
  %v56 = vunpack.c.l.b16 %v35
  %v57 = vunpack.c.l.b16 %v36
  %v58 = vunpack.c.l.b16 %v37
  %v59 = vunpack.c.l.b16 %v38
  %v60 = vunpack.c.l.b16 %v39
  %v61 = vunpack.c.l.b16 %v40
  %v62 = vunpack.c.l.b16 %v41
  %v63 = vunpack.c.l.b16 %v42
  %v64 = vpack.c.b16 %v57, %v56
  %v65 = vpack.c.b16 %v59, %v58
  %v66 = vpack.c.b16 %v61, %v60
  %v67 = vpack.c.b16 %v63, %v62
  %vm68 = vcmask 31744
  %v70 = vsel %vm68, %v64, 0
  %v73 = vsel %vm68, %v65, 0
  %v76 = vsel %vm68, %v66, 0
  %v79 = vsel %vm68, %v67, 0
  %vm81 = vcmask 1041408
  %v83 = vsel %vm81, %v43, 0
  %85 = vmatpush.bf16.msra.mxu0 0
  %86 = vmatpush.bf16.msra.mxu0 0
  %87 = vmatpush.bf16.msra.mxu0 0
  %88 = vmatpush.bf16.msra.mxu0 0
  %89 = vmatpush.bf16.msra.mxu0 0
  %90 = vmatpush.bf16.msra.mxu0 0
  %91 = vmatpush.bf16.msra.mxu0 0
  %92 = vmatpush.bf16.msra.mxu0 %v83
  %93 = vmatmul.bf16.gmra.mxu0 %v70
  %v94 = vpop.f32.mrf.mxu0
  %v95 = vadd.f32 %v46, %v94
  %v96 = vpop.f32.mrf.mxu0
  %v97 = vadd.f32 %v46, %v96
  %98 = vmatmul.bf16.gmra.mxu0 %v73
  %v99 = vpop.f32.mrf.mxu0
  %v100 = vadd.f32 %v46, %v99
  %v101 = vpop.f32.mrf.mxu0
  %v102 = vadd.f32 %v46, %v101
  %103 = vmatmul.bf16.gmra.mxu0 %v76
  %v104 = vpop.f32.mrf.mxu0
  %v105 = vadd.f32 %v46, %v104
  %v106 = vpop.f32.mrf.mxu0
  %v107 = vadd.f32 %v46, %v106
  %108 = vmatmul.bf16.gmra.mxu0 %v79
  %v109 = vpop.f32.mrf.mxu0
  %v110 = vadd.f32 %v46, %v109
  %v111 = vpop.f32.mrf.mxu0
  %v112 = vadd.f32 %v46, %v111
  %113 = vdwg.mxu0
  %114 = vst [vmem:[#allocation2] sm:$0xff] %v95
  %115 = vst [vmem:[#allocation2 + $0x8] sm:$0xff] %v97
  %116 = vst [vmem:[#allocation2 + $0x10] sm:$0xff] %v100
  %117 = vst [vmem:[#allocation2 + $0x18] sm:$0xff] %v102
  %118 = vst [vmem:[#allocation2 + $0x20] sm:$0xff] %v105
  %119 = vst [vmem:[#allocation2 + $0x28] sm:$0xff] %v107
  %120 = vst [vmem:[#allocation2 + $0x30] sm:$0xff] %v110
  %121 = vst [vmem:[#allocation2 + $0x38] sm:$0xff] %v112
  %v122 = vld [vmem:[%s2] sm:$0xf]
  %v123 = vld [vmem:[%s2 + $0x4] sm:$0xf]
  %v124 = vld [vmem:[%s2 + $0x8] sm:$0xf]
  %v125 = vld [vmem:[%s2 + $0xc] sm:$0xf]
  %v126 = vld [vmem:[#allocation2] sm:$0xff]
  %v131 = vunpack.c.l.b16 %v122
  %v132 = vunpack.c.l.b16 %v123
  %v133 = vunpack.c.l.b16 %v124
  %v134 = vunpack.c.l.b16 %v125
  %v135 = vpack.c.b16 %v132, %v131
  %v136 = vpack.c.b16 %v134, %v133
  %vm139 = vcmask 261120
  %v141 = vsel %vm139, 0, 0
  %143 = vmatpush.bf16.msra.mxu0 0
  %144 = vmatpush.bf16.msra.mxu0 0
  %145 = vmatpush.bf16.msra.mxu0 0
  %146 = vmatpush.bf16.msra.mxu0 0
  %147 = vmatpush.bf16.msra.mxu0 0
  %148 = vmatpush.bf16.msra.mxu0 0
  %149 = vmatpush.bf16.msra.mxu0 %v136
  %150 = vmatpush.bf16.msra.mxu0 %v135
  %151 = vmatmul.bf16.gmra.mxu0 %v141
  %v152 = vpop.f32.mrf.mxu0
  %v153 = vadd.f32 0.0, %v152
  %v154 = vpop.f32.mrf.mxu0
  %155 = vdwg.mxu0
  %v156 = vadd.f32 %v126, %v153
  %v157 = vxor.u32 %v156, 2147483648
  %v158 = vmul.f32 %v157, 1.442695
  %v159 = vpow.pop %v158
  %v160 = vadd.f32 %v159, 1.0
  %v161 = vrcp.pop %v160
  %v162 = vmul.f32 %v160, %v161
  %v163 = vsub.f32 1.0, %v162
  %v164 = vmul.f32 %v161, %v163
  %v165 = vadd.f32 %v161, %v164
  %vm166 = vweird.f32 %v160
  %vm167 = vweird.f32 %v161
  %vm168 = vmor %vm166, %vm167
  %v169 = vsel %vm168, %v161, %v165
  %v170 = vand.u32 2147483647, %v160
  %vm171 = vcmp.eq.f32.partialorder %v170, 8.507059e+37
  %v172 = vand.u32 %v160, 2147483648
  %v173 = vor.u32 1.1754944e-38, %v172
  %v174 = vsel %vm171, %v173, %v169
  %v175 = vmul.f32 1.0, %v174
  %v176 = vtanh.pop %v156
  %v177 = vmul.f32 %v175, 0.0
  %179 = vrot.lane.b32.xlu0 %v176, 32
  %v180 = vpop.permute.xlu0 %179
  %v182 = vmul.f32 %v175, %v180
  %184 = vrot.lane.b32.xlu0 %v182, 32
  %v185 = vpop.permute.xlu0 %184
  %v187 = vadd.f32 %v177, %v185
  %v188 = vtanh.pop %v187
  %190 = vrot.lane.b32.xlu0 %v188, 32
  %v191 = vpop.permute.xlu0 %190
  %v193 = vmul.f32 %v175, %v191
  %v194 = vpack.c.bf16 %v193, %v193
  %196 = vrot.lane.b32.xlu0 %v194, 64
  %v197 = vpop.permute.xlu0 %196
  %vm199 = vcmask 257024
  %200 = vst.msk [vmem:[#allocation3] sm:$0xf] %vm199, %v197
  %s201 = scalar_lea.vmem [#allocation2], 8
  %v202 = vld [vmem:[%s201] sm:$0xff]
  %v203 = vunpack.c.l.b16 %v194
  %v204 = vpack.c.b16 %v203, %v203
  %205 = vrot.lane.b32.xlu0 %v204, 64
  %v206 = vpop.permute.xlu0 %205
  %v208 = vsel %vm139, %v206, 0
  %210 = vmatpush.bf16.msra.mxu0 0
  %211 = vmatpush.bf16.msra.mxu0 0
  %212 = vmatpush.bf16.msra.mxu0 0
  %213 = vmatpush.bf16.msra.mxu0 0
  %214 = vmatpush.bf16.msra.mxu0 0
  %215 = vmatpush.bf16.msra.mxu0 0
  %216 = vmatpush.bf16.msra.mxu0 %v136
  %217 = vmatpush.bf16.msra.mxu0 %v135
  %218 = vmatmul.bf16.gmra.mxu0 %v208
  %v219 = vpop.f32.mrf.mxu0
  %v220 = vadd.f32 0.0, %v219
  %v221 = vpop.f32.mrf.mxu0
  %222 = vdwg.mxu0
  %v223 = vadd.f32 %v202, %v220
  %v224 = vxor.u32 %v223, 2147483648
  %v225 = vmul.f32 %v224, 1.442695
  %v226 = vpow.pop %v225
  %v227 = vadd.f32 %v226, 1.0
  %v228 = vrcp.pop %v227
  %v229 = vmul.f32 %v227, %v228
  %v230 = vsub.f32 1.0, %v229
  %v231 = vmul.f32 %v228, %v230
  %v232 = vadd.f32 %v228, %v231
  %vm233 = vweird.f32 %v227
  %vm234 = vweird.f32 %v228
  %vm235 = vmor %vm233, %vm234
  %v236 = vsel %vm235, %v228, %v232
  %v237 = vand.u32 2147483647, %v227
  %vm238 = vcmp.eq.f32.partialorder %v237, 8.507059e+37
  %v239 = vand.u32 %v227, 2147483648
  %v240 = vor.u32 1.1754944e-38, %v239
  %v241 = vsel %vm238, %v240, %v236
  %v242 = vmul.f32 1.0, %v241
  %v243 = vtanh.pop %v223
  %v244 = vmul.f32 %v242, %v187
  %246 = vrot.lane.b32.xlu0 %v243, 32
  %v247 = vpop.permute.xlu0 %246
  %v249 = vmul.f32 %v242, %v247
  %251 = vrot.lane.b32.xlu0 %v249, 32
  %v252 = vpop.permute.xlu0 %251
  %v254 = vadd.f32 %v244, %v252
  %v255 = vtanh.pop %v254
  %257 = vrot.lane.b32.xlu0 %v255, 32
  %v258 = vpop.permute.xlu0 %257
  %v260 = vmul.f32 %v242, %v258
  %v261 = vpack.c.bf16 %v260, %v260
  %263 = vrot.lane.b32.xlu0 %v261, 64
  %v264 = vpop.permute.xlu0 %263
  %s266 = scalar_lea.vmem [#allocation3], 4
  %267 = vst.msk [vmem:[%s266] sm:$0xf] %vm199, %v264
  %s268 = scalar_lea.vmem [#allocation2], 16
  %v269 = vld [vmem:[%s268] sm:$0xff]
  %v270 = vunpack.c.l.b16 %v261
  %v271 = vpack.c.b16 %v270, %v270
  %272 = vrot.lane.b32.xlu0 %v271, 64
  %v273 = vpop.permute.xlu0 %272
  %v275 = vsel %vm139, %v273, 0
  %277 = vmatpush.bf16.msra.mxu0 0
  %278 = vmatpush.bf16.msra.mxu0 0
  %279 = vmatpush.bf16.msra.mxu0 0
  %280 = vmatpush.bf16.msra.mxu0 0
  %281 = vmatpush.bf16.msra.mxu0 0
  %282 = vmatpush.bf16.msra.mxu0 0
  %283 = vmatpush.bf16.msra.mxu0 %v136
  %284 = vmatpush.bf16.msra.mxu0 %v135
  %285 = vmatmul.bf16.gmra.mxu0 %v275
  %v286 = vpop.f32.mrf.mxu0
  %v287 = vadd.f32 0.0, %v286
  %v288 = vpop.f32.mrf.mxu0
  %289 = vdwg.mxu0
  %v290 = vadd.f32 %v269, %v287
  %v291 = vxor.u32 %v290, 2147483648
  %v292 = vmul.f32 %v291, 1.442695
  %v293 = vpow.pop %v292
  %v294 = vadd.f32 %v293, 1.0
  %v295 = vrcp.pop %v294
  %v296 = vmul.f32 %v294, %v295
  %v297 = vsub.f32 1.0, %v296
  %v298 = vmul.f32 %v295, %v297
  %v299 = vadd.f32 %v295, %v298
  %vm300 = vweird.f32 %v294
  %vm301 = vweird.f32 %v295
  %vm302 = vmor %vm300, %vm301
  %v303 = vsel %vm302, %v295, %v299
  %v304 = vand.u32 2147483647, %v294
  %vm305 = vcmp.eq.f32.partialorder %v304, 8.507059e+37
  %v306 = vand.u32 %v294, 2147483648
  %v307 = vor.u32 1.1754944e-38, %v306
  %v308 = vsel %vm305, %v307, %v303
  %v309 = vmul.f32 1.0, %v308
  %v310 = vtanh.pop %v290
  %v311 = vmul.f32 %v309, %v254
  %313 = vrot.lane.b32.xlu0 %v310, 32
  %v314 = vpop.permute.xlu0 %313
  %v316 = vmul.f32 %v309, %v314
  %318 = vrot.lane.b32.xlu0 %v316, 32
  %v319 = vpop.permute.xlu0 %318
  %v321 = vadd.f32 %v311, %v319
  %v322 = vtanh.pop %v321
  %324 = vrot.lane.b32.xlu0 %v322, 32
  %v325 = vpop.permute.xlu0 %324
  %v327 = vmul.f32 %v309, %v325
  %v328 = vpack.c.bf16 %v327, %v327
  %330 = vrot.lane.b32.xlu0 %v328, 64
  %v331 = vpop.permute.xlu0 %330
  %s333 = scalar_lea.vmem [#allocation3], 8
  %334 = vst.msk [vmem:[%s333] sm:$0xf] %vm199, %v331
  %s335 = scalar_lea.vmem [#allocation2], 24
  %v336 = vld [vmem:[%s335] sm:$0xff]
  %v337 = vunpack.c.l.b16 %v328
  %v338 = vpack.c.b16 %v337, %v337
  %339 = vrot.lane.b32.xlu0 %v338, 64
  %v340 = vpop.permute.xlu0 %339
  %v342 = vsel %vm139, %v340, 0
  %344 = vmatpush.bf16.msra.mxu0 0
  %345 = vmatpush.bf16.msra.mxu0 0
  %346 = vmatpush.bf16.msra.mxu0 0
  %347 = vmatpush.bf16.msra.mxu0 0
  %348 = vmatpush.bf16.msra.mxu0 0
  %349 = vmatpush.bf16.msra.mxu0 0
  %350 = vmatpush.bf16.msra.mxu0 %v136
  %351 = vmatpush.bf16.msra.mxu0 %v135
  %352 = vmatmul.bf16.gmra.mxu0 %v342
  %v353 = vpop.f32.mrf.mxu0
  %v354 = vadd.f32 0.0, %v353
  %v355 = vpop.f32.mrf.mxu0
  %356 = vdwg.mxu0
  %v357 = vadd.f32 %v336, %v354
  %v358 = vxor.u32 %v357, 2147483648
  %v359 = vmul.f32 %v358, 1.442695
  %v360 = vpow.pop %v359
  %v361 = vadd.f32 %v360, 1.0
  %v362 = vrcp.pop %v361
  %v363 = vmul.f32 %v361, %v362
  %v364 = vsub.f32 1.0, %v363
  %v365 = vmul.f32 %v362, %v364
  %v366 = vadd.f32 %v362, %v365
  %vm367 = vweird.f32 %v361
  %vm368 = vweird.f32 %v362
  %vm369 = vmor %vm367, %vm368
  %v370 = vsel %vm369, %v362, %v366
  %v371 = vand.u32 2147483647, %v361
  %vm372 = vcmp.eq.f32.partialorder %v371, 8.507059e+37
  %v373 = vand.u32 %v361, 2147483648
  %v374 = vor.u32 1.1754944e-38, %v373
  %v375 = vsel %vm372, %v374, %v370
  %v376 = vmul.f32 1.0, %v375
  %v377 = vtanh.pop %v357
  %v378 = vmul.f32 %v376, %v321
  %380 = vrot.lane.b32.xlu0 %v377, 32
  %v381 = vpop.permute.xlu0 %380
  %v383 = vmul.f32 %v376, %v381
  %385 = vrot.lane.b32.xlu0 %v383, 32
  %v386 = vpop.permute.xlu0 %385
  %v388 = vadd.f32 %v378, %v386
  %v389 = vtanh.pop %v388
  %391 = vrot.lane.b32.xlu0 %v389, 32
  %v392 = vpop.permute.xlu0 %391
  %v394 = vmul.f32 %v376, %v392
  %v395 = vpack.c.bf16 %v394, %v394
  %397 = vrot.lane.b32.xlu0 %v395, 64
  %v398 = vpop.permute.xlu0 %397
  %s400 = scalar_lea.vmem [#allocation3], 12
  %401 = vst.msk [vmem:[%s400] sm:$0xf] %vm199, %v398
  %s402 = scalar_lea.vmem [#allocation2], 32
  %v403 = vld [vmem:[%s402] sm:$0xff]
  %v404 = vunpack.c.l.b16 %v395
  %v405 = vpack.c.b16 %v404, %v404
  %406 = vrot.lane.b32.xlu0 %v405, 64
  %v407 = vpop.permute.xlu0 %406
  %v409 = vsel %vm139, %v407, 0
  %411 = vmatpush.bf16.msra.mxu0 0
  %412 = vmatpush.bf16.msra.mxu0 0
  %413 = vmatpush.bf16.msra.mxu0 0
  %414 = vmatpush.bf16.msra.mxu0 0
  %415 = vmatpush.bf16.msra.mxu0 0
  %416 = vmatpush.bf16.msra.mxu0 0
  %417 = vmatpush.bf16.msra.mxu0 %v136
  %418 = vmatpush.bf16.msra.mxu0 %v135
  %419 = vmatmul.bf16.gmra.mxu0 %v409
  %v420 = vpop.f32.mrf.mxu0
  %v421 = vadd.f32 0.0, %v420
  %v422 = vpop.f32.mrf.mxu0
  %423 = vdwg.mxu0
  %v424 = vadd.f32 %v403, %v421
  %v425 = vxor.u32 %v424, 2147483648
  %v426 = vmul.f32 %v425, 1.442695
  %v427 = vpow.pop %v426
  %v428 = vadd.f32 %v427, 1.0
  %v429 = vrcp.pop %v428
  %v430 = vmul.f32 %v428, %v429
  %v431 = vsub.f32 1.0, %v430
  %v432 = vmul.f32 %v429, %v431
  %v433 = vadd.f32 %v429, %v432
  %vm434 = vweird.f32 %v428
  %vm435 = vweird.f32 %v429
  %vm436 = vmor %vm434, %vm435
  %v437 = vsel %vm436, %v429, %v433
  %v438 = vand.u32 2147483647, %v428
  %vm439 = vcmp.eq.f32.partialorder %v438, 8.507059e+37
  %v440 = vand.u32 %v428, 2147483648
  %v441 = vor.u32 1.1754944e-38, %v440
  %v442 = vsel %vm439, %v441, %v437
  %v443 = vmul.f32 1.0, %v442
  %v444 = vtanh.pop %v424
  %v445 = vmul.f32 %v443, %v388
  %447 = vrot.lane.b32.xlu0 %v444, 32
  %v448 = vpop.permute.xlu0 %447
  %v450 = vmul.f32 %v443, %v448
  %452 = vrot.lane.b32.xlu0 %v450, 32
  %v453 = vpop.permute.xlu0 %452
  %v455 = vadd.f32 %v445, %v453
  %v456 = vtanh.pop %v455
  %458 = vrot.lane.b32.xlu0 %v456, 32
  %v459 = vpop.permute.xlu0 %458
  %v461 = vmul.f32 %v443, %v459
  %v462 = vpack.c.bf16 %v461, %v461
  %464 = vrot.lane.b32.xlu0 %v462, 64
  %v465 = vpop.permute.xlu0 %464
  %s467 = scalar_lea.vmem [#allocation3], 16
  %468 = vst.msk [vmem:[%s467] sm:$0xf] %vm199, %v465
  %s469 = scalar_lea.vmem [#allocation2], 40
  %v470 = vld [vmem:[%s469] sm:$0xff]
  %v471 = vunpack.c.l.b16 %v462
  %v472 = vpack.c.b16 %v471, %v471
  %473 = vrot.lane.b32.xlu0 %v472, 64
  %v474 = vpop.permute.xlu0 %473
  %v476 = vsel %vm139, %v474, 0
  %478 = vmatpush.bf16.msra.mxu0 0
  %479 = vmatpush.bf16.msra.mxu0 0
  %480 = vmatpush.bf16.msra.mxu0 0
  %481 = vmatpush.bf16.msra.mxu0 0
  %482 = vmatpush.bf16.msra.mxu0 0
  %483 = vmatpush.bf16.msra.mxu0 0
  %484 = vmatpush.bf16.msra.mxu0 %v136
  %485 = vmatpush.bf16.msra.mxu0 %v135
  %486 = vmatmul.bf16.gmra.mxu0 %v476
  %v487 = vpop.f32.mrf.mxu0
  %v488 = vadd.f32 0.0, %v487
  %v489 = vpop.f32.mrf.mxu0
  %490 = vdwg.mxu0
  %v491 = vadd.f32 %v470, %v488
  %v492 = vxor.u32 %v491, 2147483648
  %v493 = vmul.f32 %v492, 1.442695
  %v494 = vpow.pop %v493
  %v495 = vadd.f32 %v494, 1.0
  %v496 = vrcp.pop %v495
  %v497 = vmul.f32 %v495, %v496
  %v498 = vsub.f32 1.0, %v497
  %v499 = vmul.f32 %v496, %v498
  %v500 = vadd.f32 %v496, %v499
  %vm501 = vweird.f32 %v495
  %vm502 = vweird.f32 %v496
  %vm503 = vmor %vm501, %vm502
  %v504 = vsel %vm503, %v496, %v500
  %v505 = vand.u32 2147483647, %v495
  %vm506 = vcmp.eq.f32.partialorder %v505, 8.507059e+37
  %v507 = vand.u32 %v495, 2147483648
  %v508 = vor.u32 1.1754944e-38, %v507
  %v509 = vsel %vm506, %v508, %v504
  %v510 = vmul.f32 1.0, %v509
  %v511 = vtanh.pop %v491
  %v512 = vmul.f32 %v510, %v455
  %514 = vrot.lane.b32.xlu0 %v511, 32
  %v515 = vpop.permute.xlu0 %514
  %v517 = vmul.f32 %v510, %v515
  %519 = vrot.lane.b32.xlu0 %v517, 32
  %v520 = vpop.permute.xlu0 %519
  %v522 = vadd.f32 %v512, %v520
  %v523 = vtanh.pop %v522
  %525 = vrot.lane.b32.xlu0 %v523, 32
  %v526 = vpop.permute.xlu0 %525
  %v528 = vmul.f32 %v510, %v526
  %v529 = vpack.c.bf16 %v528, %v528
  %531 = vrot.lane.b32.xlu0 %v529, 64
  %v532 = vpop.permute.xlu0 %531
  %s534 = scalar_lea.vmem [#allocation3], 20
  %535 = vst.msk [vmem:[%s534] sm:$0xf] %vm199, %v532
  %s536 = scalar_lea.vmem [#allocation2], 48
  %v537 = vld [vmem:[%s536] sm:$0xff]
  %v538 = vunpack.c.l.b16 %v529
  %v539 = vpack.c.b16 %v538, %v538
  %540 = vrot.lane.b32.xlu0 %v539, 64
  %v541 = vpop.permute.xlu0 %540
  %v543 = vsel %vm139, %v541, 0
  %545 = vmatpush.bf16.msra.mxu0 0
  %546 = vmatpush.bf16.msra.mxu0 0
  %547 = vmatpush.bf16.msra.mxu0 0
  %548 = vmatpush.bf16.msra.mxu0 0
  %549 = vmatpush.bf16.msra.mxu0 0
  %550 = vmatpush.bf16.msra.mxu0 0
  %551 = vmatpush.bf16.msra.mxu0 %v136
  %552 = vmatpush.bf16.msra.mxu0 %v135
  %553 = vmatmul.bf16.gmra.mxu0 %v543
  %v554 = vpop.f32.mrf.mxu0
  %v555 = vadd.f32 0.0, %v554
  %v556 = vpop.f32.mrf.mxu0
  %557 = vdwg.mxu0
  %v558 = vadd.f32 %v537, %v555
  %v559 = vxor.u32 %v558, 2147483648
  %v560 = vmul.f32 %v559, 1.442695
  %v561 = vpow.pop %v560
  %v562 = vadd.f32 %v561, 1.0
  %v563 = vrcp.pop %v562
  %v564 = vmul.f32 %v562, %v563
  %v565 = vsub.f32 1.0, %v564
  %v566 = vmul.f32 %v563, %v565
  %v567 = vadd.f32 %v563, %v566
  %vm568 = vweird.f32 %v562
  %vm569 = vweird.f32 %v563
  %vm570 = vmor %vm568, %vm569
  %v571 = vsel %vm570, %v563, %v567
  %v572 = vand.u32 2147483647, %v562
  %vm573 = vcmp.eq.f32.partialorder %v572, 8.507059e+37
  %v574 = vand.u32 %v562, 2147483648
  %v575 = vor.u32 1.1754944e-38, %v574
  %v576 = vsel %vm573, %v575, %v571
  %v577 = vmul.f32 1.0, %v576
  %v578 = vtanh.pop %v558
  %v579 = vmul.f32 %v577, %v522
  %581 = vrot.lane.b32.xlu0 %v578, 32
  %v582 = vpop.permute.xlu0 %581
  %v584 = vmul.f32 %v577, %v582
  %586 = vrot.lane.b32.xlu0 %v584, 32
  %v587 = vpop.permute.xlu0 %586
  %v589 = vadd.f32 %v579, %v587
  %v590 = vtanh.pop %v589
  %592 = vrot.lane.b32.xlu0 %v590, 32
  %v593 = vpop.permute.xlu0 %592
  %v595 = vmul.f32 %v577, %v593
  %v596 = vpack.c.bf16 %v595, %v595
  %598 = vrot.lane.b32.xlu0 %v596, 64
  %v599 = vpop.permute.xlu0 %598
  %s601 = scalar_lea.vmem [#allocation3], 24
  %602 = vst.msk [vmem:[%s601] sm:$0xf] %vm199, %v599
  %s603 = scalar_lea.vmem [#allocation2], 56
  %v604 = vld [vmem:[%s603] sm:$0xff]
  %v605 = vunpack.c.l.b16 %v596
  %v606 = vpack.c.b16 %v605, %v605
  %607 = vrot.lane.b32.xlu0 %v606, 64
  %v608 = vpop.permute.xlu0 %607
  %v610 = vsel %vm139, %v608, 0
  %612 = vmatpush.bf16.msra.mxu0 0
  %613 = vmatpush.bf16.msra.mxu0 0
  %614 = vmatpush.bf16.msra.mxu0 0
  %615 = vmatpush.bf16.msra.mxu0 0
  %616 = vmatpush.bf16.msra.mxu0 0
  %617 = vmatpush.bf16.msra.mxu0 0
  %618 = vmatpush.bf16.msra.mxu0 %v136
  %619 = vmatpush.bf16.msra.mxu0 %v135
  %620 = vmatmul.bf16.gmra.mxu0 %v610
  %v621 = vpop.f32.mrf.mxu0
  %v622 = vadd.f32 0.0, %v621
  %v623 = vpop.f32.mrf.mxu0
  %624 = vdwg.mxu0
  %v625 = vadd.f32 %v604, %v622
  %v626 = vxor.u32 %v625, 2147483648
  %v627 = vmul.f32 %v626, 1.442695
  %v628 = vpow.pop %v627
  %v629 = vadd.f32 %v628, 1.0
  %v630 = vrcp.pop %v629
  %v631 = vmul.f32 %v629, %v630
  %v632 = vsub.f32 1.0, %v631
  %v633 = vmul.f32 %v630, %v632
  %v634 = vadd.f32 %v630, %v633
  %vm635 = vweird.f32 %v629
  %vm636 = vweird.f32 %v630
  %vm637 = vmor %vm635, %vm636
  %v638 = vsel %vm637, %v630, %v634
  %v639 = vand.u32 2147483647, %v629
  %vm640 = vcmp.eq.f32.partialorder %v639, 8.507059e+37
  %v641 = vand.u32 %v629, 2147483648
  %v642 = vor.u32 1.1754944e-38, %v641
  %v643 = vsel %vm640, %v642, %v638
  %v644 = vmul.f32 1.0, %v643
  %v645 = vtanh.pop %v625
  %v646 = vmul.f32 %v644, %v589
  %648 = vrot.lane.b32.xlu0 %v645, 32
  %v649 = vpop.permute.xlu0 %648
  %v651 = vmul.f32 %v644, %v649
  %653 = vrot.lane.b32.xlu0 %v651, 32
  %v654 = vpop.permute.xlu0 %653
  %v656 = vadd.f32 %v646, %v654
  %v657 = vtanh.pop %v656
  %659 = vrot.lane.b32.xlu0 %v657, 32
  %v660 = vpop.permute.xlu0 %659
  %v662 = vmul.f32 %v644, %v660
  %v663 = vpack.c.bf16 %v662, %v662
  %665 = vrot.lane.b32.xlu0 %v663, 64
  %v666 = vpop.permute.xlu0 %665
  %s668 = scalar_lea.vmem [#allocation3], 28
  %669 = vst.msk [vmem:[%s668] sm:$0xf] %vm199, %v666
  %v670 = vld [vmem:[#allocation3] sm:$0xf]
  %v671 = vld [vmem:[#allocation3 + $0x4] sm:$0xf]
  %v672 = vld [vmem:[#allocation3 + $0x8] sm:$0xf]
  %v673 = vld [vmem:[#allocation3 + $0xc] sm:$0xf]
  %v674 = vld [vmem:[#allocation3 + $0x10] sm:$0xf]
  %v675 = vld [vmem:[#allocation3 + $0x14] sm:$0xf]
  %v676 = vld [vmem:[#allocation3 + $0x18] sm:$0xf]
  %v677 = vld [vmem:[#allocation3 + $0x1c] sm:$0xf]
  %v678 = vld [vmem:[%s4] sm:$0xf]
  %v679 = vld [vmem:[%s4 + $0x4] sm:$0xf]
  %v680 = vld [vmem:[%s4 + $0x8] sm:$0xf]
  %v681 = vld [vmem:[%s4 + $0xc] sm:$0xf]
  %v682 = vld [vmem:[%s6] sm:$0x1]
  %v684 = vperm.slane %v682, 0
  %v694 = vunpack.c.l.b16 %v670
  %v695 = vunpack.c.l.b16 %v671
  %v696 = vunpack.c.l.b16 %v672
  %v697 = vunpack.c.l.b16 %v673
  %v698 = vunpack.c.l.b16 %v674
  %v699 = vunpack.c.l.b16 %v675
  %v700 = vunpack.c.l.b16 %v676
  %v701 = vunpack.c.l.b16 %v677
  %v702 = vpack.c.b16 %v695, %v694
  %v703 = vpack.c.b16 %v697, %v696
  %v704 = vpack.c.b16 %v699, %v698
  %v705 = vpack.c.b16 %v701, %v700
  %v710 = vunpack.c.l.b16 %v678
  %v711 = vunpack.c.l.b16 %v679
  %v712 = vunpack.c.l.b16 %v680
  %v713 = vunpack.c.l.b16 %v681
  %v714 = vpack.c.b16 %v711, %v710
  %v715 = vpack.c.b16 %v713, %v712
  %v719 = vsel %vm139, %v702, 0
  %v722 = vsel %vm139, %v703, 0
  %v725 = vsel %vm139, %v704, 0
  %v728 = vsel %vm139, %v705, 0
  %730 = vmatpush.bf16.msra.mxu0 0
  %731 = vmatpush.bf16.msra.mxu0 0
  %732 = vmatpush.bf16.msra.mxu0 0
  %733 = vmatpush.bf16.msra.mxu0 0
  %734 = vmatpush.bf16.msra.mxu0 0
  %735 = vmatpush.bf16.msra.mxu0 0
  %736 = vmatpush.bf16.msra.mxu0 %v715
  %737 = vmatpush.bf16.msra.mxu0 %v714
  %738 = vmatmul.bf16.gmra.mxu0 %v719
  %v739 = vpop.f32.mrf.mxu0
  %v740 = vadd.f32 %v684, %v739
  %v741 = vpop.f32.mrf.mxu0
  %v742 = vadd.f32 %v684, %v741
  %743 = vmatmul.bf16.gmra.mxu0 %v722
  %v744 = vpop.f32.mrf.mxu0
  %v745 = vadd.f32 %v684, %v744
  %v746 = vpop.f32.mrf.mxu0
  %v747 = vadd.f32 %v684, %v746
  %748 = vmatmul.bf16.gmra.mxu0 %v725
  %v749 = vpop.f32.mrf.mxu0
  %v750 = vadd.f32 %v684, %v749
  %v751 = vpop.f32.mrf.mxu0
  %v752 = vadd.f32 %v684, %v751
  %753 = vmatmul.bf16.gmra.mxu0 %v728
  %v754 = vpop.f32.mrf.mxu0
  %v755 = vadd.f32 %v684, %v754
  %v756 = vpop.f32.mrf.mxu0
  %v757 = vadd.f32 %v684, %v756
  %758 = vdwg.mxu0
  %759 = vst [vmem:[#allocation2] sm:$0xff] %v740
  %760 = vst [vmem:[#allocation2 + $0x8] sm:$0xff] %v742
  %761 = vst [vmem:[#allocation2 + $0x10] sm:$0xff] %v745
  %762 = vst [vmem:[#allocation2 + $0x18] sm:$0xff] %v747
  %763 = vst [vmem:[#allocation2 + $0x20] sm:$0xff] %v750
  %764 = vst [vmem:[#allocation2 + $0x28] sm:$0xff] %v752
  %765 = vst [vmem:[#allocation2 + $0x30] sm:$0xff] %v755
  %766 = vst [vmem:[#allocation2 + $0x38] sm:$0xff] %v757
  %v767 = vld [vmem:[%s5] sm:$0xf]
  %v768 = vld [vmem:[%s5 + $0x4] sm:$0xf]
  %v769 = vld [vmem:[%s5 + $0x8] sm:$0xf]
  %v770 = vld [vmem:[%s5 + $0xc] sm:$0xf]
  %v771 = vld [vmem:[#allocation2] sm:$0xff]
  %v776 = vunpack.c.l.b16 %v767
  %v777 = vunpack.c.l.b16 %v768
  %v778 = vunpack.c.l.b16 %v769
  %v779 = vunpack.c.l.b16 %v770
  %v780 = vpack.c.b16 %v777, %v776
  %v781 = vpack.c.b16 %v779, %v778
  %784 = vmatpush.bf16.msra.mxu0 0
  %785 = vmatpush.bf16.msra.mxu0 0
  %786 = vmatpush.bf16.msra.mxu0 0
  %787 = vmatpush.bf16.msra.mxu0 0
  %788 = vmatpush.bf16.msra.mxu0 0
  %789 = vmatpush.bf16.msra.mxu0 0
  %790 = vmatpush.bf16.msra.mxu0 %v781
  %791 = vmatpush.bf16.msra.mxu0 %v780
  %792 = vmatmul.bf16.gmra.mxu0 %v141
  %v793 = vpop.f32.mrf.mxu0
  %v794 = vadd.f32 0.0, %v793
  %v795 = vpop.f32.mrf.mxu0
  %796 = vdwg.mxu0
  %v797 = vadd.f32 %v771, %v794
  %v798 = vxor.u32 %v797, 2147483648
  %v799 = vmul.f32 %v798, 1.442695
  %v800 = vpow.pop %v799
  %v801 = vadd.f32 %v800, 1.0
  %v802 = vrcp.pop %v801
  %v803 = vmul.f32 %v801, %v802
  %v804 = vsub.f32 1.0, %v803
  %v805 = vmul.f32 %v802, %v804
  %v806 = vadd.f32 %v802, %v805
  %vm807 = vweird.f32 %v801
  %vm808 = vweird.f32 %v802
  %vm809 = vmor %vm807, %vm808
  %v810 = vsel %vm809, %v802, %v806
  %v811 = vand.u32 2147483647, %v801
  %vm812 = vcmp.eq.f32.partialorder %v811, 8.507059e+37
  %v813 = vand.u32 %v801, 2147483648
  %v814 = vor.u32 1.1754944e-38, %v813
  %v815 = vsel %vm812, %v814, %v810
  %v816 = vmul.f32 1.0, %v815
  %v817 = vtanh.pop %v797
  %v818 = vmul.f32 %v816, 0.0
  %820 = vrot.lane.b32.xlu0 %v817, 32
  %v821 = vpop.permute.xlu0 %820
  %v823 = vmul.f32 %v816, %v821
  %825 = vrot.lane.b32.xlu0 %v823, 32
  %v826 = vpop.permute.xlu0 %825
  %v828 = vadd.f32 %v818, %v826
  %v829 = vtanh.pop %v828
  %831 = vrot.lane.b32.xlu0 %v829, 32
  %v832 = vpop.permute.xlu0 %831
  %v834 = vmul.f32 %v816, %v832
  %v835 = vld [vmem:[%s201] sm:$0xff]
  %v836 = vpack.c.bf16 %v834, %v834
  %838 = vrot.lane.b32.xlu0 %v836, 64
  %v839 = vpop.permute.xlu0 %838
  %v841 = vsel %vm139, %v839, 0
  %843 = vmatpush.bf16.msra.mxu0 0
  %844 = vmatpush.bf16.msra.mxu0 0
  %845 = vmatpush.bf16.msra.mxu0 0
  %846 = vmatpush.bf16.msra.mxu0 0
  %847 = vmatpush.bf16.msra.mxu0 0
  %848 = vmatpush.bf16.msra.mxu0 0
  %849 = vmatpush.bf16.msra.mxu0 %v781
  %850 = vmatpush.bf16.msra.mxu0 %v780
  %851 = vmatmul.bf16.gmra.mxu0 %v841
  %v852 = vpop.f32.mrf.mxu0
  %v853 = vadd.f32 0.0, %v852
  %v854 = vpop.f32.mrf.mxu0
  %855 = vdwg.mxu0
  %v856 = vadd.f32 %v835, %v853
  %v857 = vxor.u32 %v856, 2147483648
  %v858 = vmul.f32 %v857, 1.442695
  %v859 = vpow.pop %v858
  %v860 = vadd.f32 %v859, 1.0
  %v861 = vrcp.pop %v860
  %v862 = vmul.f32 %v860, %v861
  %v863 = vsub.f32 1.0, %v862
  %v864 = vmul.f32 %v861, %v863
  %v865 = vadd.f32 %v861, %v864
  %vm866 = vweird.f32 %v860
  %vm867 = vweird.f32 %v861
  %vm868 = vmor %vm866, %vm867
  %v869 = vsel %vm868, %v861, %v865
  %v870 = vand.u32 2147483647, %v860
  %vm871 = vcmp.eq.f32.partialorder %v870, 8.507059e+37
  %v872 = vand.u32 %v860, 2147483648
  %v873 = vor.u32 1.1754944e-38, %v872
  %v874 = vsel %vm871, %v873, %v869
  %v875 = vmul.f32 1.0, %v874
  %v876 = vtanh.pop %v856
  %v877 = vmul.f32 %v875, %v828
  %879 = vrot.lane.b32.xlu0 %v876, 32
  %v880 = vpop.permute.xlu0 %879
  %v882 = vmul.f32 %v875, %v880
  %884 = vrot.lane.b32.xlu0 %v882, 32
  %v885 = vpop.permute.xlu0 %884
  %v887 = vadd.f32 %v877, %v885
  %v888 = vtanh.pop %v887
  %890 = vrot.lane.b32.xlu0 %v888, 32
  %v891 = vpop.permute.xlu0 %890
  %v893 = vmul.f32 %v875, %v891
  %v894 = vld [vmem:[%s268] sm:$0xff]
  %v895 = vpack.c.bf16 %v893, %v893
  %897 = vrot.lane.b32.xlu0 %v895, 64
  %v898 = vpop.permute.xlu0 %897
  %v900 = vsel %vm139, %v898, 0
  %902 = vmatpush.bf16.msra.mxu0 0
  %903 = vmatpush.bf16.msra.mxu0 0
  %904 = vmatpush.bf16.msra.mxu0 0
  %905 = vmatpush.bf16.msra.mxu0 0
  %906 = vmatpush.bf16.msra.mxu0 0
  %907 = vmatpush.bf16.msra.mxu0 0
  %908 = vmatpush.bf16.msra.mxu0 %v781
  %909 = vmatpush.bf16.msra.mxu0 %v780
  %910 = vmatmul.bf16.gmra.mxu0 %v900
  %v911 = vpop.f32.mrf.mxu0
  %v912 = vadd.f32 0.0, %v911
  %v913 = vpop.f32.mrf.mxu0
  %914 = vdwg.mxu0
  %v915 = vadd.f32 %v894, %v912
  %v916 = vxor.u32 %v915, 2147483648
  %v917 = vmul.f32 %v916, 1.442695
  %v918 = vpow.pop %v917
  %v919 = vadd.f32 %v918, 1.0
  %v920 = vrcp.pop %v919
  %v921 = vmul.f32 %v919, %v920
  %v922 = vsub.f32 1.0, %v921
  %v923 = vmul.f32 %v920, %v922
  %v924 = vadd.f32 %v920, %v923
  %vm925 = vweird.f32 %v919
  %vm926 = vweird.f32 %v920
  %vm927 = vmor %vm925, %vm926
  %v928 = vsel %vm927, %v920, %v924
  %v929 = vand.u32 2147483647, %v919
  %vm930 = vcmp.eq.f32.partialorder %v929, 8.507059e+37
  %v931 = vand.u32 %v919, 2147483648
  %v932 = vor.u32 1.1754944e-38, %v931
  %v933 = vsel %vm930, %v932, %v928
  %v934 = vmul.f32 1.0, %v933
  %v935 = vtanh.pop %v915
  %v936 = vmul.f32 %v934, %v887
  %938 = vrot.lane.b32.xlu0 %v935, 32
  %v939 = vpop.permute.xlu0 %938
  %v941 = vmul.f32 %v934, %v939
  %943 = vrot.lane.b32.xlu0 %v941, 32
  %v944 = vpop.permute.xlu0 %943
  %v946 = vadd.f32 %v936, %v944
  %v947 = vtanh.pop %v946
  %949 = vrot.lane.b32.xlu0 %v947, 32
  %v950 = vpop.permute.xlu0 %949
  %v952 = vmul.f32 %v934, %v950
  %v953 = vld [vmem:[%s335] sm:$0xff]
  %v954 = vpack.c.bf16 %v952, %v952
  %956 = vrot.lane.b32.xlu0 %v954, 64
  %v957 = vpop.permute.xlu0 %956
  %v959 = vsel %vm139, %v957, 0
  %961 = vmatpush.bf16.msra.mxu0 0
  %962 = vmatpush.bf16.msra.mxu0 0
  %963 = vmatpush.bf16.msra.mxu0 0
  %964 = vmatpush.bf16.msra.mxu0 0
  %965 = vmatpush.bf16.msra.mxu0 0
  %966 = vmatpush.bf16.msra.mxu0 0
  %967 = vmatpush.bf16.msra.mxu0 %v781
  %968 = vmatpush.bf16.msra.mxu0 %v780
  %969 = vmatmul.bf16.gmra.mxu0 %v959
  %v970 = vpop.f32.mrf.mxu0
  %v971 = vadd.f32 0.0, %v970
  %v972 = vpop.f32.mrf.mxu0
  %973 = vdwg.mxu0
  %v974 = vadd.f32 %v953, %v971
  %v975 = vxor.u32 %v974, 2147483648
  %v976 = vmul.f32 %v975, 1.442695
  %v977 = vpow.pop %v976
  %v978 = vadd.f32 %v977, 1.0
  %v979 = vrcp.pop %v978
  %v980 = vmul.f32 %v978, %v979
  %v981 = vsub.f32 1.0, %v980
  %v982 = vmul.f32 %v979, %v981
  %v983 = vadd.f32 %v979, %v982
  %vm984 = vweird.f32 %v978
  %vm985 = vweird.f32 %v979
  %vm986 = vmor %vm984, %vm985
  %v987 = vsel %vm986, %v979, %v983
  %v988 = vand.u32 2147483647, %v978
  %vm989 = vcmp.eq.f32.partialorder %v988, 8.507059e+37
  %v990 = vand.u32 %v978, 2147483648
  %v991 = vor.u32 1.1754944e-38, %v990
  %v992 = vsel %vm989, %v991, %v987
  %v993 = vmul.f32 1.0, %v992
  %v994 = vtanh.pop %v974
  %v995 = vmul.f32 %v993, %v946
  %997 = vrot.lane.b32.xlu0 %v994, 32
  %v998 = vpop.permute.xlu0 %997
  %v1000 = vmul.f32 %v993, %v998
  %1002 = vrot.lane.b32.xlu0 %v1000, 32
  %v1003 = vpop.permute.xlu0 %1002
  %v1005 = vadd.f32 %v995, %v1003
  %v1006 = vtanh.pop %v1005
  %1008 = vrot.lane.b32.xlu0 %v1006, 32
  %v1009 = vpop.permute.xlu0 %1008
  %v1011 = vmul.f32 %v993, %v1009
  %v1012 = vld [vmem:[%s402] sm:$0xff]
  %v1013 = vpack.c.bf16 %v1011, %v1011
  %1015 = vrot.lane.b32.xlu0 %v1013, 64
  %v1016 = vpop.permute.xlu0 %1015
  %v1018 = vsel %vm139, %v1016, 0
  %1020 = vmatpush.bf16.msra.mxu0 0
  %1021 = vmatpush.bf16.msra.mxu0 0
  %1022 = vmatpush.bf16.msra.mxu0 0
  %1023 = vmatpush.bf16.msra.mxu0 0
  %1024 = vmatpush.bf16.msra.mxu0 0
  %1025 = vmatpush.bf16.msra.mxu0 0
  %1026 = vmatpush.bf16.msra.mxu0 %v781
  %1027 = vmatpush.bf16.msra.mxu0 %v780
  %1028 = vmatmul.bf16.gmra.mxu0 %v1018
  %v1029 = vpop.f32.mrf.mxu0
  %v1030 = vadd.f32 0.0, %v1029
  %v1031 = vpop.f32.mrf.mxu0
  %1032 = vdwg.mxu0
  %v1033 = vadd.f32 %v1012, %v1030
  %v1034 = vxor.u32 %v1033, 2147483648
  %v1035 = vmul.f32 %v1034, 1.442695
  %v1036 = vpow.pop %v1035
  %v1037 = vadd.f32 %v1036, 1.0
  %v1038 = vrcp.pop %v1037
  %v1039 = vmul.f32 %v1037, %v1038
  %v1040 = vsub.f32 1.0, %v1039
  %v1041 = vmul.f32 %v1038, %v1040
  %v1042 = vadd.f32 %v1038, %v1041
  %vm1043 = vweird.f32 %v1037
  %vm1044 = vweird.f32 %v1038
  %vm1045 = vmor %vm1043, %vm1044
  %v1046 = vsel %vm1045, %v1038, %v1042
  %v1047 = vand.u32 2147483647, %v1037
  %vm1048 = vcmp.eq.f32.partialorder %v1047, 8.507059e+37
  %v1049 = vand.u32 %v1037, 2147483648
  %v1050 = vor.u32 1.1754944e-38, %v1049
  %v1051 = vsel %vm1048, %v1050, %v1046
  %v1052 = vmul.f32 1.0, %v1051
  %v1053 = vtanh.pop %v1033
  %v1054 = vmul.f32 %v1052, %v1005
  %1056 = vrot.lane.b32.xlu0 %v1053, 32
  %v1057 = vpop.permute.xlu0 %1056
  %v1059 = vmul.f32 %v1052, %v1057
  %1061 = vrot.lane.b32.xlu0 %v1059, 32
  %v1062 = vpop.permute.xlu0 %1061
  %v1064 = vadd.f32 %v1054, %v1062
  %v1065 = vtanh.pop %v1064
  %1067 = vrot.lane.b32.xlu0 %v1065, 32
  %v1068 = vpop.permute.xlu0 %1067
  %v1070 = vmul.f32 %v1052, %v1068
  %v1071 = vld [vmem:[%s469] sm:$0xff]
  %v1072 = vpack.c.bf16 %v1070, %v1070
  %1074 = vrot.lane.b32.xlu0 %v1072, 64
  %v1075 = vpop.permute.xlu0 %1074
  %v1077 = vsel %vm139, %v1075, 0
  %1079 = vmatpush.bf16.msra.mxu0 0
  %1080 = vmatpush.bf16.msra.mxu0 0
  %1081 = vmatpush.bf16.msra.mxu0 0
  %1082 = vmatpush.bf16.msra.mxu0 0
  %1083 = vmatpush.bf16.msra.mxu0 0
  %1084 = vmatpush.bf16.msra.mxu0 0
  %1085 = vmatpush.bf16.msra.mxu0 %v781
  %1086 = vmatpush.bf16.msra.mxu0 %v780
  %1087 = vmatmul.bf16.gmra.mxu0 %v1077
  %v1088 = vpop.f32.mrf.mxu0
  %v1089 = vadd.f32 0.0, %v1088
  %v1090 = vpop.f32.mrf.mxu0
  %1091 = vdwg.mxu0
  %v1092 = vadd.f32 %v1071, %v1089
  %v1093 = vxor.u32 %v1092, 2147483648
  %v1094 = vmul.f32 %v1093, 1.442695
  %v1095 = vpow.pop %v1094
  %v1096 = vadd.f32 %v1095, 1.0
  %v1097 = vrcp.pop %v1096
  %v1098 = vmul.f32 %v1096, %v1097
  %v1099 = vsub.f32 1.0, %v1098
  %v1100 = vmul.f32 %v1097, %v1099
  %v1101 = vadd.f32 %v1097, %v1100
  %vm1102 = vweird.f32 %v1096
  %vm1103 = vweird.f32 %v1097
  %vm1104 = vmor %vm1102, %vm1103
  %v1105 = vsel %vm1104, %v1097, %v1101
  %v1106 = vand.u32 2147483647, %v1096
  %vm1107 = vcmp.eq.f32.partialorder %v1106, 8.507059e+37
  %v1108 = vand.u32 %v1096, 2147483648
  %v1109 = vor.u32 1.1754944e-38, %v1108
  %v1110 = vsel %vm1107, %v1109, %v1105
  %v1111 = vmul.f32 1.0, %v1110
  %v1112 = vtanh.pop %v1092
  %v1113 = vmul.f32 %v1111, %v1064
  %1115 = vrot.lane.b32.xlu0 %v1112, 32
  %v1116 = vpop.permute.xlu0 %1115
  %v1118 = vmul.f32 %v1111, %v1116
  %1120 = vrot.lane.b32.xlu0 %v1118, 32
  %v1121 = vpop.permute.xlu0 %1120
  %v1123 = vadd.f32 %v1113, %v1121
  %v1124 = vtanh.pop %v1123
  %1126 = vrot.lane.b32.xlu0 %v1124, 32
  %v1127 = vpop.permute.xlu0 %1126
  %v1129 = vmul.f32 %v1111, %v1127
  %v1130 = vld [vmem:[%s536] sm:$0xff]
  %v1131 = vpack.c.bf16 %v1129, %v1129
  %1133 = vrot.lane.b32.xlu0 %v1131, 64
  %v1134 = vpop.permute.xlu0 %1133
  %v1136 = vsel %vm139, %v1134, 0
  %1138 = vmatpush.bf16.msra.mxu0 0
  %1139 = vmatpush.bf16.msra.mxu0 0
  %1140 = vmatpush.bf16.msra.mxu0 0
  %1141 = vmatpush.bf16.msra.mxu0 0
  %1142 = vmatpush.bf16.msra.mxu0 0
  %1143 = vmatpush.bf16.msra.mxu0 0
  %1144 = vmatpush.bf16.msra.mxu0 %v781
  %1145 = vmatpush.bf16.msra.mxu0 %v780
  %1146 = vmatmul.bf16.gmra.mxu0 %v1136
  %v1147 = vpop.f32.mrf.mxu0
  %v1148 = vadd.f32 0.0, %v1147
  %v1149 = vpop.f32.mrf.mxu0
  %1150 = vdwg.mxu0
  %v1151 = vadd.f32 %v1130, %v1148
  %v1152 = vxor.u32 %v1151, 2147483648
  %v1153 = vmul.f32 %v1152, 1.442695
  %v1154 = vpow.pop %v1153
  %v1155 = vadd.f32 %v1154, 1.0
  %v1156 = vrcp.pop %v1155
  %v1157 = vmul.f32 %v1155, %v1156
  %v1158 = vsub.f32 1.0, %v1157
  %v1159 = vmul.f32 %v1156, %v1158
  %v1160 = vadd.f32 %v1156, %v1159
  %vm1161 = vweird.f32 %v1155
  %vm1162 = vweird.f32 %v1156
  %vm1163 = vmor %vm1161, %vm1162
  %v1164 = vsel %vm1163, %v1156, %v1160
  %v1165 = vand.u32 2147483647, %v1155
  %vm1166 = vcmp.eq.f32.partialorder %v1165, 8.507059e+37
  %v1167 = vand.u32 %v1155, 2147483648
  %v1168 = vor.u32 1.1754944e-38, %v1167
  %v1169 = vsel %vm1166, %v1168, %v1164
  %v1170 = vmul.f32 1.0, %v1169
  %v1171 = vtanh.pop %v1151
  %v1172 = vmul.f32 %v1170, %v1123
  %1174 = vrot.lane.b32.xlu0 %v1171, 32
  %v1175 = vpop.permute.xlu0 %1174
  %v1177 = vmul.f32 %v1170, %v1175
  %1179 = vrot.lane.b32.xlu0 %v1177, 32
  %v1180 = vpop.permute.xlu0 %1179
  %v1182 = vadd.f32 %v1172, %v1180
  %v1183 = vtanh.pop %v1182
  %1185 = vrot.lane.b32.xlu0 %v1183, 32
  %v1186 = vpop.permute.xlu0 %1185
  %v1188 = vmul.f32 %v1170, %v1186
  %v1189 = vld [vmem:[%s603] sm:$0xff]
  %v1190 = vpack.c.bf16 %v1188, %v1188
  %1192 = vrot.lane.b32.xlu0 %v1190, 64
  %v1193 = vpop.permute.xlu0 %1192
  %v1195 = vsel %vm139, %v1193, 0
  %1197 = vmatpush.bf16.msra.mxu0 0
  %1198 = vmatpush.bf16.msra.mxu0 0
  %1199 = vmatpush.bf16.msra.mxu0 0
  %1200 = vmatpush.bf16.msra.mxu0 0
  %1201 = vmatpush.bf16.msra.mxu0 0
  %1202 = vmatpush.bf16.msra.mxu0 0
  %1203 = vmatpush.bf16.msra.mxu0 %v781
  %1204 = vmatpush.bf16.msra.mxu0 %v780
  %1205 = vmatmul.bf16.gmra.mxu0 %v1195
  %v1206 = vpop.f32.mrf.mxu0
  %v1207 = vadd.f32 0.0, %v1206
  %v1208 = vpop.f32.mrf.mxu0
  %1209 = vdwg.mxu0
  %v1210 = vadd.f32 %v1189, %v1207
  %v1211 = vxor.u32 %v1210, 2147483648
  %v1212 = vmul.f32 %v1211, 1.442695
  %v1213 = vpow.pop %v1212
  %v1214 = vadd.f32 %v1213, 1.0
  %v1215 = vrcp.pop %v1214
  %v1216 = vmul.f32 %v1214, %v1215
  %v1217 = vsub.f32 1.0, %v1216
  %v1218 = vmul.f32 %v1215, %v1217
  %v1219 = vadd.f32 %v1215, %v1218
  %vm1220 = vweird.f32 %v1214
  %vm1221 = vweird.f32 %v1215
  %vm1222 = vmor %vm1220, %vm1221
  %v1223 = vsel %vm1222, %v1215, %v1219
  %v1224 = vand.u32 2147483647, %v1214
  %vm1225 = vcmp.eq.f32.partialorder %v1224, 8.507059e+37
  %v1226 = vand.u32 %v1214, 2147483648
  %v1227 = vor.u32 1.1754944e-38, %v1226
  %v1228 = vsel %vm1225, %v1227, %v1223
  %v1229 = vmul.f32 1.0, %v1228
  %v1230 = vtanh.pop %v1210
  %v1231 = vmul.f32 %v1229, %v1182
  %1233 = vrot.lane.b32.xlu0 %v1230, 32
  %v1234 = vpop.permute.xlu0 %1233
  %v1236 = vmul.f32 %v1229, %v1234
  %1238 = vrot.lane.b32.xlu0 %v1236, 32
  %v1239 = vpop.permute.xlu0 %1238
  %v1241 = vadd.f32 %v1231, %v1239
  %v1242 = vtanh.pop %v1241
  %1244 = vrot.lane.b32.xlu0 %v1242, 32
  %v1245 = vpop.permute.xlu0 %1244
  %v1247 = vmul.f32 %v1229, %v1245
  %v1248 = vld [vmem:[%s7] sm:$0xff]
  %v1249 = vld [vmem:[%s7 + $0x8] sm:$0xff]
  %v1250 = vld [vmem:[%s7 + $0x10] sm:$0xff]
  %v1251 = vld [vmem:[%s7 + $0x18] sm:$0xff]
  %v1252 = vld [vmem:[#allocation4] sm:$0x1]
  %v1254 = vperm.slane %v1252, 0
  %1257 = vrot.lane.b32.xlu0 %v1247, 64
  %v1258 = vpop.permute.xlu0 %1257
  %v1259 = vsel %vm139, %v1258, 0
  %1261 = vmatpush.msra.mxu0 0.0
  %1262 = vmatpush.msra.mxu0 0.0
  %1263 = vmatpush.msra.mxu0 0.0
  %1264 = vmatpush.msra.mxu0 0.0
  %1265 = vmatpush.msra.mxu0 0.0
  %1266 = vmatpush.msra.mxu0 0.0
  %1267 = vmatpush.msra.mxu0 0.0
  %1268 = vmatpush.msra.mxu0 0.0
  %1269 = vmatpush.msra.mxu0 0.0
  %1270 = vmatpush.msra.mxu0 0.0
  %1271 = vmatpush.msra.mxu0 0.0
  %1272 = vmatpush.msra.mxu0 0.0
  %1273 = vmatpush.msra.mxu0 %v1251
  %1274 = vmatpush.msra.mxu0 %v1250
  %1275 = vmatpush.msra.mxu0 %v1249
  %1276 = vmatpush.msra.mxu0 %v1248
  %1277 = vmatmul.f32.gmra.mxu0 %v1259
  %v1278 = vpop.f32.mrf.mxu0
  %v1279 = vadd.f32 %v1254, %v1278
  %1280 = vdwg.mxu0
  %vm1281 = vcmask 7168
  %1282 = vst.msk [vmem:[%s9] sm:$0xff] %vm1281, %v1279
  // Predicated region
  $region38: #{tpu_custom_call.1} parent=0 // pred_check
    _
  $region39: #{tpu_custom_call.1} parent=0 // pred_check_branch
    %1284 = sbr.rel (0) target = $region41
  $region40: #{tpu_custom_call.1} parent=0 // pred_region
    _
  $region41: #{tpu_custom_call.1} parent=0 // pred_fallthru
    _
  // Predicated region
  $region42: #{tpu_custom_call.1} parent=0 // pred_check
    _
  $region43: #{tpu_custom_call.1} parent=0 // pred_check_branch
    %1286 = sbr.rel (0) target = $region45
  $region44: #{tpu_custom_call.1} parent=0 // pred_region
    _
  $region45: #{tpu_custom_call.1} parent=0 // pred_fallthru
    _

</llo_original>
